<compile_context>
chip_gen: v6e
topology: v6e:2x2x1
jax: 0.10.0
libtpu: 0.0.40
codegen_flags: <defaults>
</compile_context>

<pallas_src>
import jax
import jax.numpy as jnp
from jax.experimental import pallas as pl
from jax.experimental.pallas import tpu as pltpu

D = 128            # per-modality feature dim (module hard-codes 128)
TM_DEFAULT = 256   # rows per grid step (multiple of 8 sublanes, fills MXU M)


def _cross_interaction_kernel(xs_ref, xg_ref, w_ref, b_ref, o_ref):
    # xs_ref/xg_ref: (TM, D) f32 row tiles
    # w_ref: (6, D, D) bf16  -> [w0a, w0b, w1a, w1b, wl_seq_half, wl_graph_half]
    # b_ref: (5, D)   f32    -> [b0a, b0b, b1a, b1b, bl]
    xs = xs_ref[...]
    xg = xg_ref[...]
    xs_bf = xs.astype(jnp.bfloat16)
    xg_bf = xg.astype(jnp.bfloat16)

    # ---- Branch 0: crossInteraction0(x_graph), dotted row-wise with x_seq ----
    h0 = jnp.maximum(
        jnp.dot(xg_bf, w_ref[0], preferred_element_type=jnp.float32) + b_ref[0],
        0.0,
    )
    m0 = jnp.dot(h0.astype(jnp.bfloat16), w_ref[1],
                 preferred_element_type=jnp.float32) + b_ref[1]
    # CI0 = tanh(einsum('bij,bij->bi', m0, x_seq)) + 1   (per-row dot product)
    ci0 = jnp.tanh(jnp.sum(m0 * xs, axis=-1, keepdims=True)) + 1.0
    xs_s = xs * ci0
    # seq half of the final Linear(256 -> 128)
    out = jnp.dot(xs_s.astype(jnp.bfloat16), w_ref[4],
                  preferred_element_type=jnp.float32)

    # ---- Branch 1: crossInteraction1(x_seq), dotted row-wise with x_graph ----
    h1 = jnp.maximum(
        jnp.dot(xs_bf, w_ref[2], preferred_element_type=jnp.float32) + b_ref[2],
        0.0,
    )
    m1 = jnp.dot(h1.astype(jnp.bfloat16), w_ref[3],
                 preferred_element_type=jnp.float32) + b_ref[3]
    ci1 = jnp.tanh(jnp.sum(m1 * xg, axis=-1, keepdims=True)) + 1.0
    xg_s = xg * ci1
    out = out + jnp.dot(xg_s.astype(jnp.bfloat16), w_ref[5],
                        preferred_element_type=jnp.float32)

    o_ref[...] = (out + b_ref[4]).astype(o_ref.dtype)


def cross_interaction(x_seq, x_graph, params, *, tm=TM_DEFAULT):
    """x_seq, x_graph: (B, L, 128) float32.  Returns (B, L, 128) float32."""
    B, L, d = x_seq.shape
    assert d == D and x_graph.shape == x_seq.shape
    M = B * L
    grid_m = pl.cdiv(M, tm)
    M_pad = grid_m * tm

    xs = x_seq.reshape(M, D).astype(jnp.float32)
    xg = x_graph.reshape(M, D).astype(jnp.float32)
    if M_pad != M:
        pad = M_pad - M
        xs = jnp.pad(xs, ((0, pad), (0, 0)))
        xg = jnp.pad(xg, ((0, pad), (0, 0)))

    (w0a, b0a, w0b, b0b, w1a, b1a, w1b, b1b, wl, bl) = params
    # PyTorch Linear stores (out, in); kernel uses (in, out).
    wl_t = wl.T  # (256, 128); rows 0:128 -> seq half, 128:256 -> graph half
    w_packed = jnp.stack(
        [w0a.T, w0b.T, w1a.T, w1b.T, wl_t[:D], wl_t[D:]]
    ).astype(jnp.bfloat16)                                  # (6, D, D) bf16
    b_packed = jnp.stack([b0a, b0b, b1a, b1b, bl]).astype(jnp.float32)  # (5, D)

    # TODO(synk): on v6e/v7x a K=256 block-diagonal weight fusion (concat the
    # two modalities on the feature axis) would double per-pass MXU width; kept
    # as two K=128 matmuls here for portability (v5e MXU is 128-wide natively).

    row_spec = pl.BlockSpec((tm, D), lambda i: (i, 0))
    w_spec = pl.BlockSpec((6, D, D), lambda i: (0, 0, 0))   # resident weights
    b_spec = pl.BlockSpec((5, D), lambda i: (0, 0))         # resident biases

    out = pl.pallas_call(
        _cross_interaction_kernel,
        out_shape=jax.ShapeDtypeStruct((M_pad, D), jnp.float32),
        grid_spec=pltpu.PrefetchScalarGridSpec(
            num_scalar_prefetch=0,
            grid=(grid_m,),
            in_specs=[row_spec, row_spec, w_spec, b_spec],
            out_specs=row_spec,
        ),
        compiler_params=pltpu.CompilerParams(
            dimension_semantics=("parallel",),
        ),
    )(xs, xg, w_packed, b_packed)

    return out[:M].reshape(B, L, D)


def _reference(x_seq, x_graph, params):
    """Pure f32 JAX reference matching the PyTorch forward."""
    (w0a, b0a, w0b, b0b, w1a, b1a, w1b, b1b, wl, bl) = params

    def mlp(x, wa, ba, wb, bb):
        h = jnp.maximum(x @ wa.T + ba, 0.0)
        return h @ wb.T + bb

    ci0 = jnp.tanh(jnp.einsum("bij,bij->bi",
                              mlp(x_graph, w0a, b0a, w0b, b0b), x_seq)) + 1.0
    ci1 = jnp.tanh(jnp.einsum("bij,bij->bi",
                              mlp(x_seq, w1a, b1a, w1b, b1b), x_graph)) + 1.0
    xs = jnp.einsum("bij,bi->bij", x_seq, ci0)
    xg = jnp.einsum("bij,bi->bij", x_graph, ci1)
    x = jnp.concatenate((xs, xg), axis=2)
    return x @ wl.T + bl


def _init_params(key):
    ks = jax.random.split(key, 10)
    bound = 1.0 / jnp.sqrt(D)
    u = lambda k, shape, b: jax.random.uniform(k, shape, jnp.float32, -b, b)
    w0a, b0a = u(ks[0], (D, D), bound), u(ks[1], (D,), bound)
    w0b, b0b = u(ks[2], (D, D), bound), u(ks[3], (D,), bound)
    w1a, b1a = u(ks[4], (D, D), bound), u(ks[5], (D,), bound)
    w1b, b1b = u(ks[6], (D, D), bound), u(ks[7], (D,), bound)
    bound_l = 1.0 / jnp.sqrt(2 * D)
    wl = u(ks[8], (D, 2 * D), bound_l)
    bl = u(ks[9], (D,), bound_l)
    return (w0a, b0a, w0b, b0b, w1a, b1a, w1b, b1b, wl, bl)


if __name__ == "__main__":
    key = jax.random.PRNGKey(0)
    kp, ks, kg = jax.random.split(key, 3)

    # Small shapes; B*L = 300 is deliberately NOT a multiple of TM so the
    # padding path and a 2-step grid both get exercised.
    B, L = 3, 100
    params = _init_params(kp)
    x_seq = jax.random.normal(ks, (B, L, D), jnp.float32)
    x_graph = jax.random.normal(kg, (B, L, D), jnp.float32)

    out = cross_interaction(x_seq, x_graph, params)
    out = jax.block_until_ready(out)

    ref = _reference(x_seq, x_graph, params)
    assert out.shape == (B, L, D)
    # Tolerance relaxed vs. the fp32-only version: matmuls use bf16 operands
    # with f32 accumulation (deliberate, per perf review).
    assert jnp.allclose(out, ref, atol=5e-2, rtol=5e-2), "mismatch vs reference"
    print("KERNEL_OK")
</pallas_src>

<mosaic_0001>
module attributes {stable_mosaic.version = 11 : i64} {
  func.func @_cross_interaction_kernel(%arg0: i32, %arg1: memref<256x128xf32, #tpu.memory_space<vmem>>, %arg2: memref<256x128xf32, #tpu.memory_space<vmem>>, %arg3: memref<6x128x128xbf16, #tpu.memory_space<vmem>>, %arg4: memref<5x128xf32, #tpu.memory_space<vmem>>, %arg5: memref<256x128xf32, #tpu.memory_space<vmem>>) attributes {dimension_semantics = [#tpu.dimension_semantics<parallel>], iteration_bounds = array<i64: 2>, scalar_prefetch = 0 : i64, scratch_operands = 0 : i64, tpu.core_type = #tpu.core_type<tc>, window_params = [{transform_indices = @transform_0, window_bounds = array<i64: 256, 128>}, {transform_indices = @transform_1, window_bounds = array<i64: 256, 128>}, {pipeline_mode = #tpu.pipeline_mode<synchronous>, transform_indices = @transform_2, window_bounds = array<i64: 6, 128, 128>}, {pipeline_mode = #tpu.pipeline_mode<synchronous>, transform_indices = @transform_3, window_bounds = array<i64: 5, 128>}, {transform_indices = @transform_4, window_bounds = array<i64: 256, 128>}]} {
    %c0 = arith.constant 0 : index
    %c0_0 = arith.constant 0 : index
    %0 = vector.load %arg1[%c0, %c0_0] : memref<256x128xf32, #tpu.memory_space<vmem>>, vector<256x128xf32>
    %c0_1 = arith.constant 0 : index
    %c0_2 = arith.constant 0 : index
    %1 = vector.load %arg2[%c0_1, %c0_2] : memref<256x128xf32, #tpu.memory_space<vmem>>, vector<256x128xf32>
    %2 = arith.truncf %0 : vector<256x128xf32> to vector<256x128xbf16>
    %3 = arith.truncf %1 : vector<256x128xf32> to vector<256x128xbf16>
    %c0_3 = arith.constant 0 : index
    %c0_4 = arith.constant 0 : index
    %c0_5 = arith.constant 0 : index
    %4 = vector.load %arg3[%c0_3, %c0_4, %c0_5] : memref<6x128x128xbf16, #tpu.memory_space<vmem>>, vector<1x128x128xbf16>
    %5 = vector.shape_cast %4 : vector<1x128x128xbf16> to vector<128x128xbf16>
    %cst = arith.constant dense<0.000000e+00> : vector<256x128xf32>
    %6 = tpu.matmul %3, %5, %cst {dimension_numbers = #tpu.dot_dimension_numbers<[1], [0], [0], [1], [0, 0, 1, 1], [], []>} : vector<256x128xbf16>, vector<128x128xbf16>, vector<256x128xf32> -> vector<256x128xf32>
    %c0_6 = arith.constant 0 : index
    %c0_7 = arith.constant 0 : index
    %7 = vector.load %arg4[%c0_6, %c0_7] : memref<5x128xf32, #tpu.memory_space<vmem>>, vector<1x128xf32>
    %8 = vector.shape_cast %7 : vector<1x128xf32> to vector<128xf32>
    %9 = vector.shape_cast %8 : vector<128xf32> to vector<1x128xf32>
    %10 = vector.broadcast %9 : vector<1x128xf32> to vector<256x128xf32>
    %11 = arith.addf %6, %10 : vector<256x128xf32>
    %cst_8 = arith.constant 0.000000e+00 : f32
    %12 = vector.broadcast %cst_8 : f32 to vector<256x128xf32>
    %13 = arith.maximumf %11, %12 : vector<256x128xf32>
    %14 = arith.truncf %13 : vector<256x128xf32> to vector<256x128xbf16>
    %c1 = arith.constant 1 : index
    %c0_9 = arith.constant 0 : index
    %c0_10 = arith.constant 0 : index
    %15 = vector.load %arg3[%c1, %c0_9, %c0_10] : memref<6x128x128xbf16, #tpu.memory_space<vmem>>, vector<1x128x128xbf16>
    %16 = vector.shape_cast %15 : vector<1x128x128xbf16> to vector<128x128xbf16>
    %cst_11 = arith.constant dense<0.000000e+00> : vector<256x128xf32>
    %17 = tpu.matmul %14, %16, %cst_11 {dimension_numbers = #tpu.dot_dimension_numbers<[1], [0], [0], [1], [0, 0, 1, 1], [], []>} : vector<256x128xbf16>, vector<128x128xbf16>, vector<256x128xf32> -> vector<256x128xf32>
    %c1_12 = arith.constant 1 : index
    %c0_13 = arith.constant 0 : index
    %18 = vector.load %arg4[%c1_12, %c0_13] : memref<5x128xf32, #tpu.memory_space<vmem>>, vector<1x128xf32>
    %19 = vector.shape_cast %18 : vector<1x128xf32> to vector<128xf32>
    %20 = vector.shape_cast %19 : vector<128xf32> to vector<1x128xf32>
    %21 = vector.broadcast %20 : vector<1x128xf32> to vector<256x128xf32>
    %22 = arith.addf %17, %21 : vector<256x128xf32>
    %23 = arith.mulf %22, %0 : vector<256x128xf32>
    %cst_14 = arith.constant dense<0.000000e+00> : vector<256xf32>
    %24 = vector.multi_reduction <add>, %23, %cst_14 [1] : vector<256x128xf32> to vector<256xf32>
    %25 = vector.shape_cast %24 : vector<256xf32> to vector<256x1xf32>
    %26 = math.tanh %25 : vector<256x1xf32>
    %cst_15 = arith.constant 1.000000e+00 : f32
    %27 = vector.broadcast %cst_15 : f32 to vector<256x1xf32>
    %28 = arith.addf %26, %27 : vector<256x1xf32>
    %29 = vector.broadcast %28 : vector<256x1xf32> to vector<256x128xf32>
    %30 = arith.mulf %0, %29 : vector<256x128xf32>
    %31 = arith.truncf %30 : vector<256x128xf32> to vector<256x128xbf16>
    %c4 = arith.constant 4 : index
    %c0_16 = arith.constant 0 : index
    %c0_17 = arith.constant 0 : index
    %32 = vector.load %arg3[%c4, %c0_16, %c0_17] : memref<6x128x128xbf16, #tpu.memory_space<vmem>>, vector<1x128x128xbf16>
    %33 = vector.shape_cast %32 : vector<1x128x128xbf16> to vector<128x128xbf16>
    %cst_18 = arith.constant dense<0.000000e+00> : vector<256x128xf32>
    %34 = tpu.matmul %31, %33, %cst_18 {dimension_numbers = #tpu.dot_dimension_numbers<[1], [0], [0], [1], [0, 0, 1, 1], [], []>} : vector<256x128xbf16>, vector<128x128xbf16>, vector<256x128xf32> -> vector<256x128xf32>
    %c2 = arith.constant 2 : index
    %c0_19 = arith.constant 0 : index
    %c0_20 = arith.constant 0 : index
    %35 = vector.load %arg3[%c2, %c0_19, %c0_20] : memref<6x128x128xbf16, #tpu.memory_space<vmem>>, vector<1x128x128xbf16>
    %36 = vector.shape_cast %35 : vector<1x128x128xbf16> to vector<128x128xbf16>
    %cst_21 = arith.constant dense<0.000000e+00> : vector<256x128xf32>
    %37 = tpu.matmul %2, %36, %cst_21 {dimension_numbers = #tpu.dot_dimension_numbers<[1], [0], [0], [1], [0, 0, 1, 1], [], []>} : vector<256x128xbf16>, vector<128x128xbf16>, vector<256x128xf32> -> vector<256x128xf32>
    %c2_22 = arith.constant 2 : index
    %c0_23 = arith.constant 0 : index
    %38 = vector.load %arg4[%c2_22, %c0_23] : memref<5x128xf32, #tpu.memory_space<vmem>>, vector<1x128xf32>
    %39 = vector.shape_cast %38 : vector<1x128xf32> to vector<128xf32>
    %40 = vector.shape_cast %39 : vector<128xf32> to vector<1x128xf32>
    %41 = vector.broadcast %40 : vector<1x128xf32> to vector<256x128xf32>
    %42 = arith.addf %37, %41 : vector<256x128xf32>
    %cst_24 = arith.constant 0.000000e+00 : f32
    %43 = vector.broadcast %cst_24 : f32 to vector<256x128xf32>
    %44 = arith.maximumf %42, %43 : vector<256x128xf32>
    %45 = arith.truncf %44 : vector<256x128xf32> to vector<256x128xbf16>
    %c3 = arith.constant 3 : index
    %c0_25 = arith.constant 0 : index
    %c0_26 = arith.constant 0 : index
    %46 = vector.load %arg3[%c3, %c0_25, %c0_26] : memref<6x128x128xbf16, #tpu.memory_space<vmem>>, vector<1x128x128xbf16>
    %47 = vector.shape_cast %46 : vector<1x128x128xbf16> to vector<128x128xbf16>
    %cst_27 = arith.constant dense<0.000000e+00> : vector<256x128xf32>
    %48 = tpu.matmul %45, %47, %cst_27 {dimension_numbers = #tpu.dot_dimension_numbers<[1], [0], [0], [1], [0, 0, 1, 1], [], []>} : vector<256x128xbf16>, vector<128x128xbf16>, vector<256x128xf32> -> vector<256x128xf32>
    %c3_28 = arith.constant 3 : index
    %c0_29 = arith.constant 0 : index
    %49 = vector.load %arg4[%c3_28, %c0_29] : memref<5x128xf32, #tpu.memory_space<vmem>>, vector<1x128xf32>
    %50 = vector.shape_cast %49 : vector<1x128xf32> to vector<128xf32>
    %51 = vector.shape_cast %50 : vector<128xf32> to vector<1x128xf32>
    %52 = vector.broadcast %51 : vector<1x128xf32> to vector<256x128xf32>
    %53 = arith.addf %48, %52 : vector<256x128xf32>
    %54 = arith.mulf %53, %1 : vector<256x128xf32>
    %cst_30 = arith.constant dense<0.000000e+00> : vector<256xf32>
    %55 = vector.multi_reduction <add>, %54, %cst_30 [1] : vector<256x128xf32> to vector<256xf32>
    %56 = vector.shape_cast %55 : vector<256xf32> to vector<256x1xf32>
    %57 = math.tanh %56 : vector<256x1xf32>
    %cst_31 = arith.constant 1.000000e+00 : f32
    %58 = vector.broadcast %cst_31 : f32 to vector<256x1xf32>
    %59 = arith.addf %57, %58 : vector<256x1xf32>
    %60 = vector.broadcast %59 : vector<256x1xf32> to vector<256x128xf32>
    %61 = arith.mulf %1, %60 : vector<256x128xf32>
    %62 = arith.truncf %61 : vector<256x128xf32> to vector<256x128xbf16>
    %c5 = arith.constant 5 : index
    %c0_32 = arith.constant 0 : index
    %c0_33 = arith.constant 0 : index
    %63 = vector.load %arg3[%c5, %c0_32, %c0_33] : memref<6x128x128xbf16, #tpu.memory_space<vmem>>, vector<1x128x128xbf16>
    %64 = vector.shape_cast %63 : vector<1x128x128xbf16> to vector<128x128xbf16>
    %cst_34 = arith.constant dense<0.000000e+00> : vector<256x128xf32>
    %65 = tpu.matmul %62, %64, %cst_34 {dimension_numbers = #tpu.dot_dimension_numbers<[1], [0], [0], [1], [0, 0, 1, 1], [], []>} : vector<256x128xbf16>, vector<128x128xbf16>, vector<256x128xf32> -> vector<256x128xf32>
    %66 = arith.addf %34, %65 : vector<256x128xf32>
    %c4_35 = arith.constant 4 : index
    %c0_36 = arith.constant 0 : index
    %67 = vector.load %arg4[%c4_35, %c0_36] : memref<5x128xf32, #tpu.memory_space<vmem>>, vector<1x128xf32>
    %68 = vector.shape_cast %67 : vector<1x128xf32> to vector<128xf32>
    %69 = vector.shape_cast %68 : vector<128xf32> to vector<1x128xf32>
    %70 = vector.broadcast %69 : vector<1x128xf32> to vector<256x128xf32>
    %71 = arith.addf %66, %70 : vector<256x128xf32>
    %c0_37 = arith.constant 0 : index
    %c0_38 = arith.constant 0 : index
    %72 = vector.load %arg5[%c0_37, %c0_38] : memref<256x128xf32, #tpu.memory_space<vmem>>, vector<256x128xf32>
    tpu.vector_store %arg5[%c0_37, %c0_38], %71 {strides = array<i32>} : memref<256x128xf32, #tpu.memory_space<vmem>>, vector<256x128xf32>,
    return
  }
  func.func @transform_0(%arg0: i32) -> (i32, i32) {
    %c0_i32 = arith.constant 0 : i32
    %c0_i32_0 = arith.constant 0 : i32
    return %arg0, %c0_i32 : i32, i32
  }
  func.func @transform_1(%arg0: i32) -> (i32, i32) {
    %c0_i32 = arith.constant 0 : i32
    %c0_i32_0 = arith.constant 0 : i32
    return %arg0, %c0_i32 : i32, i32
  }
  func.func @transform_2(%arg0: i32) -> (i32, i32, i32) {
    %c0_i32 = arith.constant 0 : i32
    %c0_i32_0 = arith.constant 0 : i32
    %c0_i32_1 = arith.constant 0 : i32
    %c0_i32_2 = arith.constant 0 : i32
    return %c0_i32, %c0_i32_0, %c0_i32_1 : i32, i32, i32
  }
  func.func @transform_3(%arg0: i32) -> (i32, i32) {
    %c0_i32 = arith.constant 0 : i32
    %c0_i32_0 = arith.constant 0 : i32
    %c0_i32_1 = arith.constant 0 : i32
    return %c0_i32, %c0_i32_0 : i32, i32
  }
  func.func @transform_4(%arg0: i32) -> (i32, i32) {
    %c0_i32 = arith.constant 0 : i32
    %c0_i32_0 = arith.constant 0 : i32
    return %arg0, %c0_i32 : i32, i32
  }
}

</mosaic_0001>

<llo_original>
// kernel: tpu_custom_call.1
$region0: #{tpu_custom_call.1}
  #allocation0 [shape = 'u32[]', space=smem, size = 0x4, offset = 0x4, fixed_abs, tag = 'smem constant byte address 0x4 - core index']
  #allocation1 [shape = 'u32[144,128]{1,0:T(1,128)}', space=vmem, size = 0x12000, scoped, tag = 'internal scratch']
  %s0 = inlined_call_operand.hbm [shape: f32[512,128], index: 0, kind: input, shape index: {}]
  %s1 = inlined_call_operand.hbm [shape: f32[512,128], index: 1, kind: input, shape index: {}]
  %s2 = inlined_call_operand.hbm [shape: bf16[6,128,128], index: 2, kind: input, shape index: {}]
  %s3 = inlined_call_operand.hbm [shape: f32[5,128], index: 3, kind: input, shape index: {}]
  %s4 = inlined_call_operand.hbm [shape: f32[512,128], index: 4, kind: output, shape index: {}]
  %s5 = sld [smem:[#allocation0]]
  $region65: #{tpu_custom_call.1} parent=0
    _
  %s7 = ssub.s32 1, %s5
  %s8 = scalar_select 0, %s7, %s5
  $region1: #{tpu_custom_call.1} parent=0
    #allocation2 [shape = 'u8[262144]{0}', space=vmem, size = 0x40000, scoped, tag = 'input window, operand 0']
    #allocation3 [shape = 's32[2]{0}', space=sflag, size = 0x8, scoped, tag = 'scoped memory for tpu_custom_call.1']
    #allocation4 [shape = 's32[2]{0}', space=sflag, size = 0x8, scoped, tag = 'scoped memory for tpu_custom_call.1']
    #allocation5 [shape = 'u8[262144]{0}', space=vmem, size = 0x40000, scoped, tag = 'input window, operand 1']
    #allocation6 [shape = 's32[2]{0}', space=sflag, size = 0x8, scoped, tag = 'scoped memory for tpu_custom_call.1']
    #allocation7 [shape = 'u8[196608]{0}', space=vmem, size = 0x30000, scoped, tag = 'input window, operand 2, single buffered']
    #allocation8 [shape = 'u8[4096]{0}', space=vmem, size = 0x1000, scoped, tag = 'input window, operand 3, single buffered']
    #allocation9 [shape = 's32[1]{0}', space=sflag, size = 0x4, scoped, tag = 'scoped memory for tpu_custom_call.1']
    #allocation10 [shape = 'u8[262144]{0}', space=vmem, size = 0x40000, scoped, tag = 'output window, operand 0']
    %9 = vsyncpa [#allocation3], 0
    %s10 = scalar_lea.sflag [#allocation3], 1
    %11 = vsyncpa %s10, 0
    %12 = vsyncpa [#allocation6], 0
    %s13 = scalar_lea.sflag [#allocation6], 1
    %14 = vsyncpa %s13, 0
    %15 = vsyncpa [#allocation9], 0
    %16 = vsyncpa [#allocation4], 0
    %s17 = scalar_lea.sflag [#allocation4], 1
    %18 = vsyncpa %s17, 0
    loop: start=0, step=1, limit=4
    $region2: #{tpu_custom_call.1} parent=1 // loop_pre_header
      _
    $region3: #{tpu_custom_call.1} parent=1 // loop_header
      %s20 = sphi 0, %s24
      %p21 = scmp.ge.s32.totalorder %s20, 4
      %s30 = sphi 0, %s32
      %s33 = sphi 0, %s30
      %s34 = sphi 0, %s33
      %s50 = sphi 0, %s34
      %s56 = sphi 0, %s58
      %s59 = sphi 0, %s56
      %s60 = sphi 0, %s59
      %s76 = sphi 0, %s60
      %s80 = sphi 0, %s80
      %s82 = sphi 0, %s80
      %s83 = sphi 0, %s82
      %s97 = sphi 0, %s83
      %s101 = sphi 0, %s101
      %s103 = sphi 0, %s101
      %s104 = sphi 0, %s103
      %s118 = sphi 0, %s104
      %s124 = sphi 0, %s126
      %s127 = sphi 0, %s124
      %s128 = sphi 0, %s127
      %s144 = sphi 0, %s128
    $region4: #{tpu_custom_call.1} parent=1 // loop_header_branch
      %23 = sbr.rel (%p21) target = $region8
    $region5: #{tpu_custom_call.1} parent=1 // loop_body
      %s25 = ssub.s32 %s20, 1
      %s26 = ssub.s32 %s20, 2
      %s27 = sadd.s32 %s20, 1
      %s28 = ssub.s32 %s20, %s27
      %p29 = scmp.eq.s32.totalorder %s28, 0
      %s31 = sadd.s32 %s30, 1
      %s32 = scalar_select %p29, %s30, %s31
      %p35 = pneg %p29
      %p36 = scmp.eq.s32.totalorder %s20, 1
      %p37 = por %p35, %p36
      %p38 = scmp.ne.s32.totalorder %s30, %s33
      %p39 = scmp.eq.s32.totalorder %s20, 0
      %p40 = por %p38, %p39
      %p41 = scmp.ne.s32.totalorder %s30, %s33
      %p42 = scmp.eq.s32.totalorder %s25, 1
      %p43 = por %p41, %p42
      %p44 = scmp.ne.s32.totalorder %s33, %s34
      %p45 = scmp.eq.s32.totalorder %s25, 0
      %p46 = por %p44, %p45
      %p47 = scmp.ne.s32.totalorder %s33, %s34
      %p48 = scmp.eq.s32.totalorder %s26, 1
      %p49 = por %p47, %p48
      %p51 = scmp.ne.s32.totalorder %s34, %s50
      %p52 = scmp.eq.s32.totalorder %s26, 0
      %p53 = por %p51, %p52
      %s54 = ssub.s32 %s20, %s27
      %p55 = scmp.eq.s32.totalorder %s54, 0
      %s57 = sadd.s32 %s56, 1
      %s58 = scalar_select %p55, %s56, %s57
      %p61 = pneg %p55
      %p62 = scmp.eq.s32.totalorder %s20, 1
      %p63 = por %p61, %p62
      %p64 = scmp.ne.s32.totalorder %s56, %s59
      %p65 = scmp.eq.s32.totalorder %s20, 0
      %p66 = por %p64, %p65
      %p67 = scmp.ne.s32.totalorder %s56, %s59
      %p68 = scmp.eq.s32.totalorder %s25, 1
      %p69 = por %p67, %p68
      %p70 = scmp.ne.s32.totalorder %s59, %s60
      %p71 = scmp.eq.s32.totalorder %s25, 0
      %p72 = por %p70, %p71
      %p73 = scmp.ne.s32.totalorder %s59, %s60
      %p74 = scmp.eq.s32.totalorder %s26, 1
      %p75 = por %p73, %p74
      %p77 = scmp.ne.s32.totalorder %s60, %s76
      %p78 = scmp.eq.s32.totalorder %s26, 0
      %p79 = por %p77, %p78
      %s81 = sadd.s32 %s80, 1
      %p84 = scmp.eq.s32.totalorder %s20, 1
      %p85 = scmp.ne.s32.totalorder %s80, %s82
      %p86 = scmp.eq.s32.totalorder %s20, 0
      %p87 = por %p85, %p86
      %p88 = scmp.ne.s32.totalorder %s80, %s82
      %p89 = scmp.eq.s32.totalorder %s25, 1
      %p90 = por %p88, %p89
      %p91 = scmp.ne.s32.totalorder %s82, %s83
      %p92 = scmp.eq.s32.totalorder %s25, 0
      %p93 = por %p91, %p92
      %p94 = scmp.ne.s32.totalorder %s82, %s83
      %p95 = scmp.eq.s32.totalorder %s26, 1
      %p96 = por %p94, %p95
      %p98 = scmp.ne.s32.totalorder %s83, %s97
      %p99 = scmp.eq.s32.totalorder %s26, 0
      %p100 = por %p98, %p99
      %s102 = sadd.s32 %s101, 1
      %p105 = scmp.eq.s32.totalorder %s20, 1
      %p106 = scmp.ne.s32.totalorder %s101, %s103
      %p107 = scmp.eq.s32.totalorder %s20, 0
      %p108 = por %p106, %p107
      %p109 = scmp.ne.s32.totalorder %s101, %s103
      %p110 = scmp.eq.s32.totalorder %s25, 1
      %p111 = por %p109, %p110
      %p112 = scmp.ne.s32.totalorder %s103, %s104
      %p113 = scmp.eq.s32.totalorder %s25, 0
      %p114 = por %p112, %p113
      %p115 = scmp.ne.s32.totalorder %s103, %s104
      %p116 = scmp.eq.s32.totalorder %s26, 1
      %p117 = por %p115, %p116
      %p119 = scmp.ne.s32.totalorder %s104, %s118
      %p120 = scmp.eq.s32.totalorder %s26, 0
      %p121 = por %p119, %p120
      %s122 = ssub.s32 %s20, %s27
      %p123 = scmp.eq.s32.totalorder %s122, 0
      %s125 = sadd.s32 %s124, 1
      %s126 = scalar_select %p123, %s124, %s125
      %p129 = pneg %p123
      %p130 = scmp.eq.s32.totalorder %s20, 1
      %p131 = por %p129, %p130
      %p132 = scmp.ne.s32.totalorder %s124, %s127
      %p133 = scmp.eq.s32.totalorder %s20, 0
      %p134 = por %p132, %p133
      %p135 = scmp.ne.s32.totalorder %s124, %s127
      %p136 = scmp.eq.s32.totalorder %s25, 1
      %p137 = por %p135, %p136
      %p138 = scmp.ne.s32.totalorder %s127, %s128
      %p139 = scmp.eq.s32.totalorder %s25, 0
      %p140 = por %p138, %p139
      %p141 = scmp.ne.s32.totalorder %s127, %s128
      %p142 = scmp.eq.s32.totalorder %s26, 1
      %p143 = por %p141, %p142
      %p145 = scmp.ne.s32.totalorder %s128, %s144
      %p146 = scmp.eq.s32.totalorder %s26, 0
      %p147 = por %p145, %p146
      %p148 = scmp.le.s32.totalorder 1, %s20
      %p149 = scmp.lt.s32.totalorder %s20, 3
      %p150 = pnand %p148, %p149
      %p151 = pneg %p150
      // Predicated region
      $region9: #{tpu_custom_call.1} parent=5 // pred_check
        _
      $region10: #{tpu_custom_call.1} parent=5 // pred_check_branch
        %153 = sbr.rel (%p150) target = $region12
      $region11: #{tpu_custom_call.1} parent=5 // pred_region
        %s154 = ssub.s32 %s20, 1
        // Predicated region
        $region13: #{tpu_custom_call.1} parent=11 // pred_check
          %p155 = pneg %p93
        $region14: #{tpu_custom_call.1} parent=11 // pred_check_branch
          %157 = sbr.rel (%p155) target = $region16
        $region15: #{tpu_custom_call.1} parent=11 // pred_region
          %s159 = ssub.s32 6144, 6144
          %160 = vsyncadd [#allocation6], %s159
          %s161 = sshll.u32 [#allocation7], 4
          %s162 = int_to_ptr.vmem [resolvable:$true] %s161
          %167 = dma.hbm_to_vmem [thread:$0]  %s2, 6144, %s162, [#allocation6], 64, 64, 4
        $region16: #{tpu_custom_call.1} parent=11 // pred_fallthru
          _
        // Predicated region
        $region17: #{tpu_custom_call.1} parent=11 // pred_check
          %p168 = pneg %p114
        $region18: #{tpu_custom_call.1} parent=11 // pred_check_branch
          %170 = sbr.rel (%p168) target = $region20
        $region19: #{tpu_custom_call.1} parent=11 // pred_region
          %s172 = ssub.s32 128, 128
          %173 = vsyncadd [#allocation9], %s172
          %s175 = sshll.u32 [#allocation8], 4
          %s176 = int_to_ptr.vmem [resolvable:$true] %s175
          %178 = dma.hbm_to_vmem [thread:$0]  %s3, 128, %s176, [#allocation9]
        $region20: #{tpu_custom_call.1} parent=11 // pred_fallthru
          _
      $region12: #{tpu_custom_call.1} parent=5 // pred_fallthru
        _
      %p179 = scmp.lt.s32.totalorder %s20, 2
      // Predicated region
      $region21: #{tpu_custom_call.1} parent=5 // pred_check
        %p180 = pneg %p179
      $region22: #{tpu_custom_call.1} parent=5 // pred_check_branch
        %182 = sbr.rel (%p180) target = $region24
      $region23: #{tpu_custom_call.1} parent=5 // pred_region
        // Predicated region
        $region25: #{tpu_custom_call.1} parent=23 // pred_check
          %p183 = pneg %p40
        $region26: #{tpu_custom_call.1} parent=23 // pred_check_branch
          %185 = sbr.rel (%p183) target = $region28
        $region27: #{tpu_custom_call.1} parent=23 // pred_region
          %s186 = sand.u32 %s30, 1
          %s187 = scalar_lea.sflag [#allocation3], %s186
          %s188 = sand.u32 %s30, 1
          %s189 = smul.addr %s188, 256
          %s190 = scalar_lea.vmem [#allocation2], %s189
          %s191 = smul.u32 32, %s20
          %s193 = ssub.s32 4096, 4096
          %194 = vsyncadd %s187, %s193
          %s195 = smul.addr %s191, 128
          %s196 = scalar_lea.hbm %s0, %s195
          %s197 = sshll.u32 %s190, 4
          %s198 = int_to_ptr.vmem [resolvable:$true] %s197
          %203 = dma.hbm_to_vmem [thread:$0]  %s196, 4096, %s198, %s187, 128, 128, 8
        $region28: #{tpu_custom_call.1} parent=23 // pred_fallthru
          _
        // Predicated region
        $region29: #{tpu_custom_call.1} parent=23 // pred_check
          %p204 = pneg %p66
        $region30: #{tpu_custom_call.1} parent=23 // pred_check_branch
          %206 = sbr.rel (%p204) target = $region32
        $region31: #{tpu_custom_call.1} parent=23 // pred_region
          %s207 = sand.u32 %s20, 1
          %s208 = scalar_lea.sflag [#allocation6], %s207
          %s209 = sand.u32 %s56, 1
          %s210 = smul.addr %s209, 256
          %s211 = scalar_lea.vmem [#allocation5], %s210
          %s212 = smul.u32 32, %s20
          %s214 = ssub.s32 4096, 4096
          %215 = vsyncadd %s208, %s214
          %s216 = smul.addr %s212, 128
          %s217 = scalar_lea.hbm %s1, %s216
          %s218 = sshll.u32 %s211, 4
          %s219 = int_to_ptr.vmem [resolvable:$true] %s218
          %224 = dma.hbm_to_vmem [thread:$0]  %s217, 4096, %s219, %s208, 128, 128, 8
        $region32: #{tpu_custom_call.1} parent=23 // pred_fallthru
          _
      $region24: #{tpu_custom_call.1} parent=5 // pred_fallthru
        _
      %p225 = scmp.le.s32.totalorder 1, %s20
      %p226 = scmp.lt.s32.totalorder %s20, 3
      %p227 = pnand %p225, %p226
      %p228 = pneg %p227
      // Predicated region
      $region33: #{tpu_custom_call.1} parent=5 // pred_check
        _
      $region34: #{tpu_custom_call.1} parent=5 // pred_check_branch
        %230 = sbr.rel (%p227) target = $region36
      $region35: #{tpu_custom_call.1} parent=5 // pred_region
        %s231 = ssub.s32 %s20, 1
        %s232 = sand.u32 %s33, 1
        %s233 = scalar_lea.sflag [#allocation3], %s232
        %s234 = sand.u32 %s33, 1
        %s235 = smul.addr %s234, 256
        %s236 = scalar_lea.vmem [#allocation2], %s235
        // Predicated region
        $region37: #{tpu_custom_call.1} parent=35 // pred_check
          %p237 = pneg %p46
        $region38: #{tpu_custom_call.1} parent=35 // pred_check_branch
          %239 = sbr.rel (%p237) target = $region40
        $region39: #{tpu_custom_call.1} parent=35 // pred_region
          %240 = dma.done %s233, 4096
        $region40: #{tpu_custom_call.1} parent=35 // pred_fallthru
          _
        %s241 = sand.u32 %s25, 1
        %s242 = scalar_lea.sflag [#allocation6], %s241
        %s243 = sand.u32 %s59, 1
        %s244 = smul.addr %s243, 256
        %s245 = scalar_lea.vmem [#allocation5], %s244
        // Predicated region
        $region41: #{tpu_custom_call.1} parent=35 // pred_check
          %p246 = pneg %p72
        $region42: #{tpu_custom_call.1} parent=35 // pred_check_branch
          %248 = sbr.rel (%p246) target = $region44
        $region43: #{tpu_custom_call.1} parent=35 // pred_region
          %249 = dma.done %s242, 4096
        $region44: #{tpu_custom_call.1} parent=35 // pred_fallthru
          _
        // Predicated region
        $region45: #{tpu_custom_call.1} parent=35 // pred_check
          %p250 = pneg %p93
        $region46: #{tpu_custom_call.1} parent=35 // pred_check_branch
          %252 = sbr.rel (%p250) target = $region48
        $region47: #{tpu_custom_call.1} parent=35 // pred_region
          %253 = dma.done [#allocation6], 6144
        $region48: #{tpu_custom_call.1} parent=35 // pred_fallthru
          _
        // Predicated region
        $region49: #{tpu_custom_call.1} parent=35 // pred_check
          %p254 = pneg %p114
        $region50: #{tpu_custom_call.1} parent=35 // pred_check_branch
          %256 = sbr.rel (%p254) target = $region52
        $region51: #{tpu_custom_call.1} parent=35 // pred_region
          %257 = dma.done [#allocation9], 128
        $region52: #{tpu_custom_call.1} parent=35 // pred_fallthru
          _
        %s258 = sand.u32 %s33, 1
        %s259 = scalar_lea.sflag [#allocation3], %s258
        %s260 = sand.u32 %s33, 1
        %s261 = smul.addr %s260, 256
        %s262 = scalar_lea.vmem [#allocation2], %s261
        %p263 = pneg %p46
        %p264 = pneg %p43
        %s265 = sand.u32 %s25, 1
        %s266 = scalar_lea.sflag [#allocation6], %s265
        %s267 = sand.u32 %s59, 1
        %s268 = smul.addr %s267, 256
        %s269 = scalar_lea.vmem [#allocation5], %s268
        %p270 = pneg %p72
        %p271 = pneg %p69
        %p272 = pneg %p93
        %p273 = pneg %p90
        %p274 = pneg %p114
        %p275 = pneg %p111
        %p276 = pneg %p140
        %p277 = pneg %p137
        %s278 = sand.u32 %s127, 1
        %s279 = scalar_lea.sflag [#allocation4], %s278
        %s280 = sand.u32 %s127, 1
        %s281 = smul.addr %s280, 256
        %s282 = scalar_lea.vmem [#allocation10], %s281
        %s283 = smul.u32 32, %s25
        %s284 = smul.u32 32, %s25
        %s285 = smul.u32 32, %s25
        %v287 = vld [vmem:[%s236] sm:$0xff]
        %v288 = vld [vmem:[%s236 + $0x8] sm:$0xff]
        %v289 = vld [vmem:[%s236 + $0x10] sm:$0xff]
        %v290 = vld [vmem:[%s236 + $0x18] sm:$0xff]
        %v291 = vld [vmem:[%s236 + $0x20] sm:$0xff]
        %v292 = vld [vmem:[%s236 + $0x28] sm:$0xff]
        %v293 = vld [vmem:[%s236 + $0x30] sm:$0xff]
        %v294 = vld [vmem:[%s236 + $0x38] sm:$0xff]
        %v295 = vld [vmem:[%s236 + $0x40] sm:$0xff]
        %v296 = vld [vmem:[%s236 + $0x48] sm:$0xff]
        %v297 = vld [vmem:[%s236 + $0x50] sm:$0xff]
        %v298 = vld [vmem:[%s236 + $0x58] sm:$0xff]
        %v299 = vld [vmem:[%s236 + $0x60] sm:$0xff]
        %v300 = vld [vmem:[%s236 + $0x68] sm:$0xff]
        %v301 = vld [vmem:[%s236 + $0x70] sm:$0xff]
        %v302 = vld [vmem:[%s236 + $0x78] sm:$0xff]
        %v303 = vld [vmem:[%s236 + $0x80] sm:$0xff]
        %v304 = vld [vmem:[%s236 + $0x88] sm:$0xff]
        %v305 = vld [vmem:[%s236 + $0x90] sm:$0xff]
        %v306 = vld [vmem:[%s236 + $0x98] sm:$0xff]
        %v307 = vld [vmem:[%s236 + $0xa0] sm:$0xff]
        %v308 = vld [vmem:[%s236 + $0xa8] sm:$0xff]
        %v309 = vld [vmem:[%s236 + $0xb0] sm:$0xff]
        %v310 = vld [vmem:[%s236 + $0xb8] sm:$0xff]
        %v311 = vld [vmem:[%s236 + $0xc0] sm:$0xff]
        %v312 = vld [vmem:[%s236 + $0xc8] sm:$0xff]
        %v313 = vld [vmem:[%s236 + $0xd0] sm:$0xff]
        %v314 = vld [vmem:[%s236 + $0xd8] sm:$0xff]
        %v315 = vld [vmem:[%s236 + $0xe0] sm:$0xff]
        %v316 = vld [vmem:[%s236 + $0xe8] sm:$0xff]
        %v317 = vld [vmem:[%s236 + $0xf0] sm:$0xff]
        %v318 = vld [vmem:[%s236 + $0xf8] sm:$0xff]
        %v319 = vld [vmem:[%s245] sm:$0xff]
        %v320 = vld [vmem:[%s245 + $0x8] sm:$0xff]
        %v321 = vld [vmem:[%s245 + $0x10] sm:$0xff]
        %v322 = vld [vmem:[%s245 + $0x18] sm:$0xff]
        %v323 = vld [vmem:[%s245 + $0x20] sm:$0xff]
        %v324 = vld [vmem:[%s245 + $0x28] sm:$0xff]
        %v325 = vld [vmem:[%s245 + $0x30] sm:$0xff]
        %v326 = vld [vmem:[%s245 + $0x38] sm:$0xff]
        %v327 = vld [vmem:[%s245 + $0x40] sm:$0xff]
        %v328 = vld [vmem:[%s245 + $0x48] sm:$0xff]
        %v329 = vld [vmem:[%s245 + $0x50] sm:$0xff]
        %v330 = vld [vmem:[%s245 + $0x58] sm:$0xff]
        %v331 = vld [vmem:[%s245 + $0x60] sm:$0xff]
        %v332 = vld [vmem:[%s245 + $0x68] sm:$0xff]
        %v333 = vld [vmem:[%s245 + $0x70] sm:$0xff]
        %v334 = vld [vmem:[%s245 + $0x78] sm:$0xff]
        %v335 = vld [vmem:[%s245 + $0x80] sm:$0xff]
        %v336 = vld [vmem:[%s245 + $0x88] sm:$0xff]
        %v337 = vld [vmem:[%s245 + $0x90] sm:$0xff]
        %v338 = vld [vmem:[%s245 + $0x98] sm:$0xff]
        %v339 = vld [vmem:[%s245 + $0xa0] sm:$0xff]
        %v340 = vld [vmem:[%s245 + $0xa8] sm:$0xff]
        %v341 = vld [vmem:[%s245 + $0xb0] sm:$0xff]
        %v342 = vld [vmem:[%s245 + $0xb8] sm:$0xff]
        %v343 = vld [vmem:[%s245 + $0xc0] sm:$0xff]
        %v344 = vld [vmem:[%s245 + $0xc8] sm:$0xff]
        %v345 = vld [vmem:[%s245 + $0xd0] sm:$0xff]
        %v346 = vld [vmem:[%s245 + $0xd8] sm:$0xff]
        %v347 = vld [vmem:[%s245 + $0xe0] sm:$0xff]
        %v348 = vld [vmem:[%s245 + $0xe8] sm:$0xff]
        %v349 = vld [vmem:[%s245 + $0xf0] sm:$0xff]
        %v350 = vld [vmem:[%s245 + $0xf8] sm:$0xff]
        %v351 = vpack.c.bf16 %v288, %v287
        %v352 = vpack.c.bf16 %v290, %v289
        %v353 = vpack.c.bf16 %v292, %v291
        %v354 = vpack.c.bf16 %v294, %v293
        %v355 = vpack.c.bf16 %v296, %v295
        %v356 = vpack.c.bf16 %v298, %v297
        %v357 = vpack.c.bf16 %v300, %v299
        %v358 = vpack.c.bf16 %v302, %v301
        %v359 = vpack.c.bf16 %v304, %v303
        %v360 = vpack.c.bf16 %v306, %v305
        %v361 = vpack.c.bf16 %v308, %v307
        %v362 = vpack.c.bf16 %v310, %v309
        %v363 = vpack.c.bf16 %v312, %v311
        %v364 = vpack.c.bf16 %v314, %v313
        %v365 = vpack.c.bf16 %v316, %v315
        %v366 = vpack.c.bf16 %v318, %v317
        %v367 = vpack.c.bf16 %v320, %v319
        %v368 = vpack.c.bf16 %v322, %v321
        %v369 = vpack.c.bf16 %v324, %v323
        %v370 = vpack.c.bf16 %v326, %v325
        %v371 = vpack.c.bf16 %v328, %v327
        %v372 = vpack.c.bf16 %v330, %v329
        %v373 = vpack.c.bf16 %v332, %v331
        %v374 = vpack.c.bf16 %v334, %v333
        %v375 = vpack.c.bf16 %v336, %v335
        %v376 = vpack.c.bf16 %v338, %v337
        %v377 = vpack.c.bf16 %v340, %v339
        %v378 = vpack.c.bf16 %v342, %v341
        %v379 = vpack.c.bf16 %v344, %v343
        %v380 = vpack.c.bf16 %v346, %v345
        %v381 = vpack.c.bf16 %v348, %v347
        %v382 = vpack.c.bf16 %v350, %v349
        %v383 = vld [vmem:[#allocation7] sm:$0xf]
        %v384 = vld [vmem:[#allocation7 + $0x4] sm:$0xf]
        %v385 = vld [vmem:[#allocation7 + $0x8] sm:$0xf]
        %v386 = vld [vmem:[#allocation7 + $0xc] sm:$0xf]
        %v387 = vld [vmem:[#allocation7 + $0x10] sm:$0xf]
        %v388 = vld [vmem:[#allocation7 + $0x14] sm:$0xf]
        %v389 = vld [vmem:[#allocation7 + $0x18] sm:$0xf]
        %v390 = vld [vmem:[#allocation7 + $0x1c] sm:$0xf]
        %v391 = vld [vmem:[#allocation7 + $0x20] sm:$0xf]
        %v392 = vld [vmem:[#allocation7 + $0x24] sm:$0xf]
        %v393 = vld [vmem:[#allocation7 + $0x28] sm:$0xf]
        %v394 = vld [vmem:[#allocation7 + $0x2c] sm:$0xf]
        %v395 = vld [vmem:[#allocation7 + $0x30] sm:$0xf]
        %v396 = vld [vmem:[#allocation7 + $0x34] sm:$0xf]
        %v397 = vld [vmem:[#allocation7 + $0x38] sm:$0xf]
        %v398 = vld [vmem:[#allocation7 + $0x3c] sm:$0xf]
        %v399 = vld [vmem:[#allocation8] sm:$0x1]
        %v400 = vlaneseq
        %v401 = vshrl.u32 %v400, 7
        %v402 = vsub.s32 0, %v401
        %v403 = vrot.slane %v399, %v402
        %v420 = vunpack.c.l.b16 %v383
        %v421 = vunpack.c.l.b16 %v384
        %v422 = vunpack.c.l.b16 %v385
        %v423 = vunpack.c.l.b16 %v386
        %v424 = vunpack.c.l.b16 %v387
        %v425 = vunpack.c.l.b16 %v388
        %v426 = vunpack.c.l.b16 %v389
        %v427 = vunpack.c.l.b16 %v390
        %v428 = vunpack.c.l.b16 %v391
        %v429 = vunpack.c.l.b16 %v392
        %v430 = vunpack.c.l.b16 %v393
        %v431 = vunpack.c.l.b16 %v394
        %v432 = vunpack.c.l.b16 %v395
        %v433 = vunpack.c.l.b16 %v396
        %v434 = vunpack.c.l.b16 %v397
        %v435 = vunpack.c.l.b16 %v398
        %v436 = vpack.c.b16 %v421, %v420
        %v437 = vpack.c.b16 %v423, %v422
        %v438 = vpack.c.b16 %v425, %v424
        %v439 = vpack.c.b16 %v427, %v426
        %v440 = vpack.c.b16 %v429, %v428
        %v441 = vpack.c.b16 %v431, %v430
        %v442 = vpack.c.b16 %v433, %v432
        %v443 = vpack.c.b16 %v435, %v434
        %452 = vmatprep.subr.bf16.mxu0 0
        %453 = vmatpush1.bf16.msra.mxu0 %v443
        %454 = vmatprep.subr.bf16.mxu0 0
        %455 = vmatpush1.bf16.msra.mxu0 %v442
        %456 = vmatprep.subr.bf16.mxu0 0
        %457 = vmatpush1.bf16.msra.mxu0 %v441
        %458 = vmatprep.subr.bf16.mxu0 0
        %459 = vmatpush1.bf16.msra.mxu0 %v440
        %460 = vmatprep.subr.bf16.mxu0 0
        %461 = vmatpush1.bf16.msra.mxu0 %v439
        %462 = vmatprep.subr.bf16.mxu0 0
        %463 = vmatpush1.bf16.msra.mxu0 %v438
        %464 = vmatprep.subr.bf16.mxu0 0
        %465 = vmatpush1.bf16.msra.mxu0 %v437
        %466 = vmatprep.subr.bf16.mxu0 0
        %467 = vmatpush1.bf16.msra.mxu0 %v436
        %468 = vmatprep.subr.bf16.mxu0 0
        %469 = vmatpush2.bf16.msra.mxu0 0
        %470 = vmatprep.subr.bf16.mxu0 0
        %471 = vmatpush2.bf16.msra.mxu0 0
        %472 = vmatprep.subr.bf16.mxu0 0
        %473 = vmatpush2.bf16.msra.mxu0 0
        %474 = vmatprep.subr.bf16.mxu0 0
        %475 = vmatpush2.bf16.msra.mxu0 0
        %476 = vmatprep.subr.bf16.mxu0 0
        %477 = vmatpush2.bf16.msra.mxu0 0
        %478 = vmatprep.subr.bf16.mxu0 0
        %479 = vmatpush2.bf16.msra.mxu0 0
        %480 = vmatprep.subr.bf16.mxu0 0
        %481 = vmatpush2.bf16.msra.mxu0 0
        %482 = vmatprep.subr.bf16.mxu0 0
        %483 = vmatpush2.bf16.msra.mxu0 0
        %484 = vmatprep.mubr.bf16.mxu0 0
        %485 = vmatmul.mubr.bf16.gmra.mxu0 %v367
        %v486 = vpop.f32.mrf.mxu0
        %v487 = vadd.f32 %v403, %v486
        %v488 = vpop.f32.mrf.mxu0
        %v489 = vpop.f32.mrf.mxu0
        %v490 = vadd.f32 %v403, %v489
        %v491 = vpop.f32.mrf.mxu0
        %492 = vmatprep.mubr.bf16.mxu0 0
        %493 = vmatmul.mubr.bf16.gmra.mxu0 %v368
        %v494 = vpop.f32.mrf.mxu0
        %v495 = vadd.f32 %v403, %v494
        %v496 = vpop.f32.mrf.mxu0
        %v497 = vpop.f32.mrf.mxu0
        %v498 = vadd.f32 %v403, %v497
        %v499 = vpop.f32.mrf.mxu0
        %500 = vmatprep.mubr.bf16.mxu0 0
        %501 = vmatmul.mubr.bf16.gmra.mxu0 %v369
        %v502 = vpop.f32.mrf.mxu0
        %v503 = vadd.f32 %v403, %v502
        %v504 = vpop.f32.mrf.mxu0
        %v505 = vpop.f32.mrf.mxu0
        %v506 = vadd.f32 %v403, %v505
        %v507 = vpop.f32.mrf.mxu0
        %508 = vmatprep.mubr.bf16.mxu0 0
        %509 = vmatmul.mubr.bf16.gmra.mxu0 %v370
        %v510 = vpop.f32.mrf.mxu0
        %v511 = vadd.f32 %v403, %v510
        %v512 = vpop.f32.mrf.mxu0
        %v513 = vpop.f32.mrf.mxu0
        %v514 = vadd.f32 %v403, %v513
        %v515 = vpop.f32.mrf.mxu0
        %516 = vmatprep.mubr.bf16.mxu0 0
        %517 = vmatmul.mubr.bf16.gmra.mxu0 %v371
        %v518 = vpop.f32.mrf.mxu0
        %v519 = vadd.f32 %v403, %v518
        %v520 = vpop.f32.mrf.mxu0
        %v521 = vpop.f32.mrf.mxu0
        %v522 = vadd.f32 %v403, %v521
        %v523 = vpop.f32.mrf.mxu0
        %524 = vmatprep.mubr.bf16.mxu0 0
        %525 = vmatmul.mubr.bf16.gmra.mxu0 %v372
        %v526 = vpop.f32.mrf.mxu0
        %v527 = vadd.f32 %v403, %v526
        %v528 = vpop.f32.mrf.mxu0
        %v529 = vpop.f32.mrf.mxu0
        %v530 = vadd.f32 %v403, %v529
        %v531 = vpop.f32.mrf.mxu0
        %532 = vmatprep.mubr.bf16.mxu0 0
        %533 = vmatmul.mubr.bf16.gmra.mxu0 %v373
        %v534 = vpop.f32.mrf.mxu0
        %v535 = vadd.f32 %v403, %v534
        %v536 = vpop.f32.mrf.mxu0
        %v537 = vpop.f32.mrf.mxu0
        %v538 = vadd.f32 %v403, %v537
        %v539 = vpop.f32.mrf.mxu0
        %540 = vmatprep.mubr.bf16.mxu0 0
        %541 = vmatmul.mubr.bf16.gmra.mxu0 %v374
        %v542 = vpop.f32.mrf.mxu0
        %v543 = vadd.f32 %v403, %v542
        %v544 = vpop.f32.mrf.mxu0
        %v545 = vpop.f32.mrf.mxu0
        %v546 = vadd.f32 %v403, %v545
        %v547 = vpop.f32.mrf.mxu0
        %548 = vmatprep.mubr.bf16.mxu0 0
        %549 = vmatmul.mubr.bf16.gmra.mxu0 %v375
        %v550 = vpop.f32.mrf.mxu0
        %v551 = vadd.f32 %v403, %v550
        %v552 = vpop.f32.mrf.mxu0
        %v553 = vpop.f32.mrf.mxu0
        %v554 = vadd.f32 %v403, %v553
        %v555 = vpop.f32.mrf.mxu0
        %556 = vmatprep.mubr.bf16.mxu0 0
        %557 = vmatmul.mubr.bf16.gmra.mxu0 %v376
        %v558 = vpop.f32.mrf.mxu0
        %v559 = vadd.f32 %v403, %v558
        %v560 = vpop.f32.mrf.mxu0
        %v561 = vpop.f32.mrf.mxu0
        %v562 = vadd.f32 %v403, %v561
        %v563 = vpop.f32.mrf.mxu0
        %564 = vmatprep.mubr.bf16.mxu0 0
        %565 = vmatmul.mubr.bf16.gmra.mxu0 %v377
        %v566 = vpop.f32.mrf.mxu0
        %v567 = vadd.f32 %v403, %v566
        %v568 = vpop.f32.mrf.mxu0
        %v569 = vpop.f32.mrf.mxu0
        %v570 = vadd.f32 %v403, %v569
        %v571 = vpop.f32.mrf.mxu0
        %572 = vmatprep.mubr.bf16.mxu0 0
        %573 = vmatmul.mubr.bf16.gmra.mxu0 %v378
        %v574 = vpop.f32.mrf.mxu0
        %v575 = vadd.f32 %v403, %v574
        %v576 = vpop.f32.mrf.mxu0
        %v577 = vpop.f32.mrf.mxu0
        %v578 = vadd.f32 %v403, %v577
        %v579 = vpop.f32.mrf.mxu0
        %580 = vmatprep.mubr.bf16.mxu0 0
        %581 = vmatmul.mubr.bf16.gmra.mxu0 %v379
        %v582 = vpop.f32.mrf.mxu0
        %v583 = vadd.f32 %v403, %v582
        %v584 = vpop.f32.mrf.mxu0
        %v585 = vpop.f32.mrf.mxu0
        %v586 = vadd.f32 %v403, %v585
        %v587 = vpop.f32.mrf.mxu0
        %588 = vmatprep.mubr.bf16.mxu0 0
        %589 = vmatmul.mubr.bf16.gmra.mxu0 %v380
        %v590 = vpop.f32.mrf.mxu0
        %v591 = vadd.f32 %v403, %v590
        %v592 = vpop.f32.mrf.mxu0
        %v593 = vpop.f32.mrf.mxu0
        %v594 = vadd.f32 %v403, %v593
        %v595 = vpop.f32.mrf.mxu0
        %596 = vmatprep.mubr.bf16.mxu0 0
        %597 = vmatmul.mubr.bf16.gmra.mxu0 %v381
        %v598 = vpop.f32.mrf.mxu0
        %v599 = vadd.f32 %v403, %v598
        %v600 = vpop.f32.mrf.mxu0
        %v601 = vpop.f32.mrf.mxu0
        %v602 = vadd.f32 %v403, %v601
        %v603 = vpop.f32.mrf.mxu0
        %604 = vmatprep.mubr.bf16.mxu0 0
        %605 = vmatmul.mubr.bf16.gmra.mxu0 %v382
        %v606 = vpop.f32.mrf.mxu0
        %v607 = vadd.f32 %v403, %v606
        %v608 = vpop.f32.mrf.mxu0
        %v609 = vpop.f32.mrf.mxu0
        %v610 = vadd.f32 %v403, %v609
        %v611 = vpop.f32.mrf.mxu0
        %612 = vdwg.mxu0
        %v613 = vmax.f32 %v487, 0.0
        %v614 = vmax.f32 %v490, 0.0
        %v615 = vmax.f32 %v495, 0.0
        %v616 = vmax.f32 %v498, 0.0
        %v617 = vmax.f32 %v503, 0.0
        %v618 = vmax.f32 %v506, 0.0
        %v619 = vmax.f32 %v511, 0.0
        %v620 = vmax.f32 %v514, 0.0
        %v621 = vmax.f32 %v519, 0.0
        %v622 = vmax.f32 %v522, 0.0
        %v623 = vmax.f32 %v527, 0.0
        %v624 = vmax.f32 %v530, 0.0
        %v625 = vmax.f32 %v535, 0.0
        %v626 = vmax.f32 %v538, 0.0
        %v627 = vmax.f32 %v543, 0.0
        %v628 = vmax.f32 %v546, 0.0
        %v629 = vmax.f32 %v551, 0.0
        %v630 = vmax.f32 %v554, 0.0
        %v631 = vmax.f32 %v559, 0.0
        %v632 = vmax.f32 %v562, 0.0
        %v633 = vmax.f32 %v567, 0.0
        %v634 = vmax.f32 %v570, 0.0
        %v635 = vmax.f32 %v575, 0.0
        %v636 = vmax.f32 %v578, 0.0
        %v637 = vmax.f32 %v583, 0.0
        %v638 = vmax.f32 %v586, 0.0
        %v639 = vmax.f32 %v591, 0.0
        %v640 = vmax.f32 %v594, 0.0
        %v641 = vmax.f32 %v599, 0.0
        %v642 = vmax.f32 %v602, 0.0
        %v643 = vmax.f32 %v607, 0.0
        %v644 = vmax.f32 %v610, 0.0
        %v645 = vpack.c.bf16 %v614, %v613
        %v646 = vpack.c.bf16 %v616, %v615
        %v647 = vpack.c.bf16 %v618, %v617
        %v648 = vpack.c.bf16 %v620, %v619
        %v649 = vpack.c.bf16 %v622, %v621
        %v650 = vpack.c.bf16 %v624, %v623
        %v651 = vpack.c.bf16 %v626, %v625
        %v652 = vpack.c.bf16 %v628, %v627
        %v653 = vpack.c.bf16 %v630, %v629
        %v654 = vpack.c.bf16 %v632, %v631
        %v655 = vpack.c.bf16 %v634, %v633
        %v656 = vpack.c.bf16 %v636, %v635
        %v657 = vpack.c.bf16 %v638, %v637
        %v658 = vpack.c.bf16 %v640, %v639
        %v659 = vpack.c.bf16 %v642, %v641
        %v660 = vpack.c.bf16 %v644, %v643
        %s661 = scalar_lea.vmem [#allocation7], 64
        %v662 = vld [vmem:[%s661] sm:$0xf]
        %v663 = vld [vmem:[%s661 + $0x4] sm:$0xf]
        %v664 = vld [vmem:[%s661 + $0x8] sm:$0xf]
        %v665 = vld [vmem:[%s661 + $0xc] sm:$0xf]
        %v666 = vld [vmem:[%s661 + $0x10] sm:$0xf]
        %v667 = vld [vmem:[%s661 + $0x14] sm:$0xf]
        %v668 = vld [vmem:[%s661 + $0x18] sm:$0xf]
        %v669 = vld [vmem:[%s661 + $0x1c] sm:$0xf]
        %v670 = vld [vmem:[%s661 + $0x20] sm:$0xf]
        %v671 = vld [vmem:[%s661 + $0x24] sm:$0xf]
        %v672 = vld [vmem:[%s661 + $0x28] sm:$0xf]
        %v673 = vld [vmem:[%s661 + $0x2c] sm:$0xf]
        %v674 = vld [vmem:[%s661 + $0x30] sm:$0xf]
        %v675 = vld [vmem:[%s661 + $0x34] sm:$0xf]
        %v676 = vld [vmem:[%s661 + $0x38] sm:$0xf]
        %v677 = vld [vmem:[%s661 + $0x3c] sm:$0xf]
        %v678 = vld [vmem:[#allocation8 + $0x1] sm:$0x1]
        %v679 = vlaneseq
        %v680 = vshrl.u32 %v679, 7
        %v681 = vsub.s32 0, %v680
        %v682 = vrot.slane %v678, %v681
        %v699 = vunpack.c.l.b16 %v662
        %v700 = vunpack.c.l.b16 %v663
        %v701 = vunpack.c.l.b16 %v664
        %v702 = vunpack.c.l.b16 %v665
        %v703 = vunpack.c.l.b16 %v666
        %v704 = vunpack.c.l.b16 %v667
        %v705 = vunpack.c.l.b16 %v668
        %v706 = vunpack.c.l.b16 %v669
        %v707 = vunpack.c.l.b16 %v670
        %v708 = vunpack.c.l.b16 %v671
        %v709 = vunpack.c.l.b16 %v672
        %v710 = vunpack.c.l.b16 %v673
        %v711 = vunpack.c.l.b16 %v674
        %v712 = vunpack.c.l.b16 %v675
        %v713 = vunpack.c.l.b16 %v676
        %v714 = vunpack.c.l.b16 %v677
        %v715 = vpack.c.b16 %v700, %v699
        %v716 = vpack.c.b16 %v702, %v701
        %v717 = vpack.c.b16 %v704, %v703
        %v718 = vpack.c.b16 %v706, %v705
        %v719 = vpack.c.b16 %v708, %v707
        %v720 = vpack.c.b16 %v710, %v709
        %v721 = vpack.c.b16 %v712, %v711
        %v722 = vpack.c.b16 %v714, %v713
        %731 = vmatprep.subr.bf16.mxu0 0
        %732 = vmatpush1.bf16.msra.mxu0 %v722
        %733 = vmatprep.subr.bf16.mxu0 0
        %734 = vmatpush1.bf16.msra.mxu0 %v721
        %735 = vmatprep.subr.bf16.mxu0 0
        %736 = vmatpush1.bf16.msra.mxu0 %v720
        %737 = vmatprep.subr.bf16.mxu0 0
        %738 = vmatpush1.bf16.msra.mxu0 %v719
        %739 = vmatprep.subr.bf16.mxu0 0
        %740 = vmatpush1.bf16.msra.mxu0 %v718
        %741 = vmatprep.subr.bf16.mxu0 0
        %742 = vmatpush1.bf16.msra.mxu0 %v717
        %743 = vmatprep.subr.bf16.mxu0 0
        %744 = vmatpush1.bf16.msra.mxu0 %v716
        %745 = vmatprep.subr.bf16.mxu0 0
        %746 = vmatpush1.bf16.msra.mxu0 %v715
        %747 = vmatprep.subr.bf16.mxu0 0
        %748 = vmatpush2.bf16.msra.mxu0 0
        %749 = vmatprep.subr.bf16.mxu0 0
        %750 = vmatpush2.bf16.msra.mxu0 0
        %751 = vmatprep.subr.bf16.mxu0 0
        %752 = vmatpush2.bf16.msra.mxu0 0
        %753 = vmatprep.subr.bf16.mxu0 0
        %754 = vmatpush2.bf16.msra.mxu0 0
        %755 = vmatprep.subr.bf16.mxu0 0
        %756 = vmatpush2.bf16.msra.mxu0 0
        %757 = vmatprep.subr.bf16.mxu0 0
        %758 = vmatpush2.bf16.msra.mxu0 0
        %759 = vmatprep.subr.bf16.mxu0 0
        %760 = vmatpush2.bf16.msra.mxu0 0
        %761 = vmatprep.subr.bf16.mxu0 0
        %762 = vmatpush2.bf16.msra.mxu0 0
        %763 = vmatprep.mubr.bf16.mxu0 0
        %764 = vmatmul.mubr.bf16.gmra.mxu0 %v645
        %v765 = vpop.f32.mrf.mxu0
        %v766 = vadd.f32 %v682, %v765
        %v767 = vpop.f32.mrf.mxu0
        %v768 = vpop.f32.mrf.mxu0
        %v769 = vadd.f32 %v682, %v768
        %v770 = vpop.f32.mrf.mxu0
        %771 = vmatprep.mubr.bf16.mxu0 0
        %772 = vmatmul.mubr.bf16.gmra.mxu0 %v646
        %v773 = vpop.f32.mrf.mxu0
        %v774 = vadd.f32 %v682, %v773
        %v775 = vpop.f32.mrf.mxu0
        %v776 = vpop.f32.mrf.mxu0
        %v777 = vadd.f32 %v682, %v776
        %v778 = vpop.f32.mrf.mxu0
        %779 = vmatprep.mubr.bf16.mxu0 0
        %780 = vmatmul.mubr.bf16.gmra.mxu0 %v647
        %v781 = vpop.f32.mrf.mxu0
        %v782 = vadd.f32 %v682, %v781
        %v783 = vpop.f32.mrf.mxu0
        %v784 = vpop.f32.mrf.mxu0
        %v785 = vadd.f32 %v682, %v784
        %v786 = vpop.f32.mrf.mxu0
        %787 = vmatprep.mubr.bf16.mxu0 0
        %788 = vmatmul.mubr.bf16.gmra.mxu0 %v648
        %v789 = vpop.f32.mrf.mxu0
        %v790 = vadd.f32 %v682, %v789
        %v791 = vpop.f32.mrf.mxu0
        %v792 = vpop.f32.mrf.mxu0
        %v793 = vadd.f32 %v682, %v792
        %v794 = vpop.f32.mrf.mxu0
        %795 = vmatprep.mubr.bf16.mxu0 0
        %796 = vmatmul.mubr.bf16.gmra.mxu0 %v649
        %v797 = vpop.f32.mrf.mxu0
        %v798 = vadd.f32 %v682, %v797
        %v799 = vpop.f32.mrf.mxu0
        %v800 = vpop.f32.mrf.mxu0
        %v801 = vadd.f32 %v682, %v800
        %v802 = vpop.f32.mrf.mxu0
        %803 = vmatprep.mubr.bf16.mxu0 0
        %804 = vmatmul.mubr.bf16.gmra.mxu0 %v650
        %v805 = vpop.f32.mrf.mxu0
        %v806 = vadd.f32 %v682, %v805
        %v807 = vpop.f32.mrf.mxu0
        %v808 = vpop.f32.mrf.mxu0
        %v809 = vadd.f32 %v682, %v808
        %v810 = vpop.f32.mrf.mxu0
        %811 = vmatprep.mubr.bf16.mxu0 0
        %812 = vmatmul.mubr.bf16.gmra.mxu0 %v651
        %v813 = vpop.f32.mrf.mxu0
        %v814 = vadd.f32 %v682, %v813
        %v815 = vpop.f32.mrf.mxu0
        %v816 = vpop.f32.mrf.mxu0
        %v817 = vadd.f32 %v682, %v816
        %v818 = vpop.f32.mrf.mxu0
        %819 = vmatprep.mubr.bf16.mxu0 0
        %820 = vmatmul.mubr.bf16.gmra.mxu0 %v652
        %v821 = vpop.f32.mrf.mxu0
        %v822 = vadd.f32 %v682, %v821
        %v823 = vpop.f32.mrf.mxu0
        %v824 = vpop.f32.mrf.mxu0
        %v825 = vadd.f32 %v682, %v824
        %v826 = vpop.f32.mrf.mxu0
        %827 = vmatprep.mubr.bf16.mxu0 0
        %828 = vmatmul.mubr.bf16.gmra.mxu0 %v653
        %v829 = vpop.f32.mrf.mxu0
        %v830 = vadd.f32 %v682, %v829
        %v831 = vpop.f32.mrf.mxu0
        %v832 = vpop.f32.mrf.mxu0
        %v833 = vadd.f32 %v682, %v832
        %v834 = vpop.f32.mrf.mxu0
        %835 = vmatprep.mubr.bf16.mxu0 0
        %836 = vmatmul.mubr.bf16.gmra.mxu0 %v654
        %v837 = vpop.f32.mrf.mxu0
        %v838 = vadd.f32 %v682, %v837
        %v839 = vpop.f32.mrf.mxu0
        %v840 = vpop.f32.mrf.mxu0
        %v841 = vadd.f32 %v682, %v840
        %v842 = vpop.f32.mrf.mxu0
        %843 = vmatprep.mubr.bf16.mxu0 0
        %844 = vmatmul.mubr.bf16.gmra.mxu0 %v655
        %v845 = vpop.f32.mrf.mxu0
        %v846 = vadd.f32 %v682, %v845
        %v847 = vpop.f32.mrf.mxu0
        %v848 = vpop.f32.mrf.mxu0
        %v849 = vadd.f32 %v682, %v848
        %v850 = vpop.f32.mrf.mxu0
        %851 = vmatprep.mubr.bf16.mxu0 0
        %852 = vmatmul.mubr.bf16.gmra.mxu0 %v656
        %v853 = vpop.f32.mrf.mxu0
        %v854 = vadd.f32 %v682, %v853
        %v855 = vpop.f32.mrf.mxu0
        %v856 = vpop.f32.mrf.mxu0
        %v857 = vadd.f32 %v682, %v856
        %v858 = vpop.f32.mrf.mxu0
        %859 = vmatprep.mubr.bf16.mxu0 0
        %860 = vmatmul.mubr.bf16.gmra.mxu0 %v657
        %v861 = vpop.f32.mrf.mxu0
        %v862 = vadd.f32 %v682, %v861
        %v863 = vpop.f32.mrf.mxu0
        %v864 = vpop.f32.mrf.mxu0
        %v865 = vadd.f32 %v682, %v864
        %v866 = vpop.f32.mrf.mxu0
        %867 = vmatprep.mubr.bf16.mxu0 0
        %868 = vmatmul.mubr.bf16.gmra.mxu0 %v658
        %v869 = vpop.f32.mrf.mxu0
        %v870 = vadd.f32 %v682, %v869
        %v871 = vpop.f32.mrf.mxu0
        %v872 = vpop.f32.mrf.mxu0
        %v873 = vadd.f32 %v682, %v872
        %v874 = vpop.f32.mrf.mxu0
        %875 = vmatprep.mubr.bf16.mxu0 0
        %876 = vmatmul.mubr.bf16.gmra.mxu0 %v659
        %v877 = vpop.f32.mrf.mxu0
        %v878 = vadd.f32 %v682, %v877
        %v879 = vpop.f32.mrf.mxu0
        %v880 = vpop.f32.mrf.mxu0
        %v881 = vadd.f32 %v682, %v880
        %v882 = vpop.f32.mrf.mxu0
        %883 = vmatprep.mubr.bf16.mxu0 0
        %884 = vmatmul.mubr.bf16.gmra.mxu0 %v660
        %v885 = vpop.f32.mrf.mxu0
        %v886 = vadd.f32 %v682, %v885
        %v887 = vpop.f32.mrf.mxu0
        %v888 = vpop.f32.mrf.mxu0
        %v889 = vadd.f32 %v682, %v888
        %v890 = vpop.f32.mrf.mxu0
        %891 = vdwg.mxu0
        %v892 = vmul.f32 %v766, %v287
        %v893 = vmul.f32 %v769, %v288
        %v894 = vmul.f32 %v774, %v289
        %v895 = vmul.f32 %v777, %v290
        %v896 = vmul.f32 %v782, %v291
        %v897 = vmul.f32 %v785, %v292
        %v898 = vmul.f32 %v790, %v293
        %v899 = vmul.f32 %v793, %v294
        %v900 = vmul.f32 %v798, %v295
        %v901 = vmul.f32 %v801, %v296
        %v902 = vmul.f32 %v806, %v297
        %v903 = vmul.f32 %v809, %v298
        %v904 = vmul.f32 %v814, %v299
        %v905 = vmul.f32 %v817, %v300
        %v906 = vmul.f32 %v822, %v301
        %v907 = vmul.f32 %v825, %v302
        %v908 = vmul.f32 %v830, %v303
        %v909 = vmul.f32 %v833, %v304
        %v910 = vmul.f32 %v838, %v305
        %v911 = vmul.f32 %v841, %v306
        %v912 = vmul.f32 %v846, %v307
        %v913 = vmul.f32 %v849, %v308
        %v914 = vmul.f32 %v854, %v309
        %v915 = vmul.f32 %v857, %v310
        %v916 = vmul.f32 %v862, %v311
        %v917 = vmul.f32 %v865, %v312
        %v918 = vmul.f32 %v870, %v313
        %v919 = vmul.f32 %v873, %v314
        %v920 = vmul.f32 %v878, %v315
        %v921 = vmul.f32 %v881, %v316
        %v922 = vmul.f32 %v886, %v317
        %v923 = vmul.f32 %v889, %v318
        %924 = vadd.xlane.f32.xlu0 %v892
        %v925 = vpop.xlane.xlu0 %924
        %926 = vadd.xlane.f32.xlu0 %v893
        %v927 = vpop.xlane.xlu0 %926
        %928 = vadd.xlane.f32.xlu0 %v894
        %v929 = vpop.xlane.xlu0 %928
        %930 = vadd.xlane.f32.xlu0 %v895
        %v931 = vpop.xlane.xlu0 %930
        %932 = vadd.xlane.f32.xlu0 %v896
        %v933 = vpop.xlane.xlu0 %932
        %934 = vadd.xlane.f32.xlu0 %v897
        %v935 = vpop.xlane.xlu0 %934
        %936 = vadd.xlane.f32.xlu0 %v898
        %v937 = vpop.xlane.xlu0 %936
        %938 = vadd.xlane.f32.xlu0 %v899
        %v939 = vpop.xlane.xlu0 %938
        %940 = vadd.xlane.f32.xlu0 %v900
        %v941 = vpop.xlane.xlu0 %940
        %942 = vadd.xlane.f32.xlu0 %v901
        %v943 = vpop.xlane.xlu0 %942
        %944 = vadd.xlane.f32.xlu0 %v902
        %v945 = vpop.xlane.xlu0 %944
        %946 = vadd.xlane.f32.xlu0 %v903
        %v947 = vpop.xlane.xlu0 %946
        %948 = vadd.xlane.f32.xlu0 %v904
        %v949 = vpop.xlane.xlu0 %948
        %950 = vadd.xlane.f32.xlu0 %v905
        %v951 = vpop.xlane.xlu0 %950
        %952 = vadd.xlane.f32.xlu0 %v906
        %v953 = vpop.xlane.xlu0 %952
        %954 = vadd.xlane.f32.xlu0 %v907
        %v955 = vpop.xlane.xlu0 %954
        %956 = vadd.xlane.f32.xlu0 %v908
        %v957 = vpop.xlane.xlu0 %956
        %958 = vadd.xlane.f32.xlu0 %v909
        %v959 = vpop.xlane.xlu0 %958
        %960 = vadd.xlane.f32.xlu0 %v910
        %v961 = vpop.xlane.xlu0 %960
        %962 = vadd.xlane.f32.xlu0 %v911
        %v963 = vpop.xlane.xlu0 %962
        %964 = vadd.xlane.f32.xlu0 %v912
        %v965 = vpop.xlane.xlu0 %964
        %966 = vadd.xlane.f32.xlu0 %v913
        %v967 = vpop.xlane.xlu0 %966
        %968 = vadd.xlane.f32.xlu0 %v914
        %v969 = vpop.xlane.xlu0 %968
        %970 = vadd.xlane.f32.xlu0 %v915
        %v971 = vpop.xlane.xlu0 %970
        %972 = vadd.xlane.f32.xlu0 %v916
        %v973 = vpop.xlane.xlu0 %972
        %974 = vadd.xlane.f32.xlu0 %v917
        %v975 = vpop.xlane.xlu0 %974
        %976 = vadd.xlane.f32.xlu0 %v918
        %v977 = vpop.xlane.xlu0 %976
        %978 = vadd.xlane.f32.xlu0 %v919
        %v979 = vpop.xlane.xlu0 %978
        %980 = vadd.xlane.f32.xlu0 %v920
        %v981 = vpop.xlane.xlu0 %980
        %982 = vadd.xlane.f32.xlu0 %v921
        %v983 = vpop.xlane.xlu0 %982
        %984 = vadd.xlane.f32.xlu0 %v922
        %v985 = vpop.xlane.xlu0 %984
        %986 = vadd.xlane.f32.xlu0 %v923
        %v987 = vpop.xlane.xlu0 %986
        %v988 = vtanh.pop %v925
        %v989 = vtanh.pop %v927
        %v990 = vtanh.pop %v929
        %v991 = vtanh.pop %v931
        %v992 = vtanh.pop %v933
        %v993 = vtanh.pop %v935
        %v994 = vtanh.pop %v937
        %v995 = vtanh.pop %v939
        %v996 = vtanh.pop %v941
        %v997 = vtanh.pop %v943
        %v998 = vtanh.pop %v945
        %v999 = vtanh.pop %v947
        %v1000 = vtanh.pop %v949
        %v1001 = vtanh.pop %v951
        %v1002 = vtanh.pop %v953
        %v1003 = vtanh.pop %v955
        %v1004 = vtanh.pop %v957
        %v1005 = vtanh.pop %v959
        %v1006 = vtanh.pop %v961
        %v1007 = vtanh.pop %v963
        %v1008 = vtanh.pop %v965
        %v1009 = vtanh.pop %v967
        %v1010 = vtanh.pop %v969
        %v1011 = vtanh.pop %v971
        %v1012 = vtanh.pop %v973
        %v1013 = vtanh.pop %v975
        %v1014 = vtanh.pop %v977
        %v1015 = vtanh.pop %v979
        %v1016 = vtanh.pop %v981
        %v1017 = vtanh.pop %v983
        %v1018 = vtanh.pop %v985
        %v1019 = vtanh.pop %v987
        %v1020 = vadd.f32 %v988, 1.0
        %v1021 = vadd.f32 %v989, 1.0
        %v1022 = vadd.f32 %v990, 1.0
        %v1023 = vadd.f32 %v991, 1.0
        %v1024 = vadd.f32 %v992, 1.0
        %v1025 = vadd.f32 %v993, 1.0
        %v1026 = vadd.f32 %v994, 1.0
        %v1027 = vadd.f32 %v995, 1.0
        %v1028 = vadd.f32 %v996, 1.0
        %v1029 = vadd.f32 %v997, 1.0
        %v1030 = vadd.f32 %v998, 1.0
        %v1031 = vadd.f32 %v999, 1.0
        %v1032 = vadd.f32 %v1000, 1.0
        %v1033 = vadd.f32 %v1001, 1.0
        %v1034 = vadd.f32 %v1002, 1.0
        %v1035 = vadd.f32 %v1003, 1.0
        %v1036 = vadd.f32 %v1004, 1.0
        %v1037 = vadd.f32 %v1005, 1.0
        %v1038 = vadd.f32 %v1006, 1.0
        %v1039 = vadd.f32 %v1007, 1.0
        %v1040 = vadd.f32 %v1008, 1.0
        %v1041 = vadd.f32 %v1009, 1.0
        %v1042 = vadd.f32 %v1010, 1.0
        %v1043 = vadd.f32 %v1011, 1.0
        %v1044 = vadd.f32 %v1012, 1.0
        %v1045 = vadd.f32 %v1013, 1.0
        %v1046 = vadd.f32 %v1014, 1.0
        %v1047 = vadd.f32 %v1015, 1.0
        %v1048 = vadd.f32 %v1016, 1.0
        %v1049 = vadd.f32 %v1017, 1.0
        %v1050 = vadd.f32 %v1018, 1.0
        %v1051 = vadd.f32 %v1019, 1.0
        %v1052 = vmul.f32 %v287, %v1020
        %v1053 = vmul.f32 %v288, %v1021
        %v1054 = vmul.f32 %v289, %v1022
        %v1055 = vmul.f32 %v290, %v1023
        %v1056 = vmul.f32 %v291, %v1024
        %v1057 = vmul.f32 %v292, %v1025
        %v1058 = vmul.f32 %v293, %v1026
        %v1059 = vmul.f32 %v294, %v1027
        %v1060 = vmul.f32 %v295, %v1028
        %v1061 = vmul.f32 %v296, %v1029
        %v1062 = vmul.f32 %v297, %v1030
        %v1063 = vmul.f32 %v298, %v1031
        %v1064 = vmul.f32 %v299, %v1032
        %v1065 = vmul.f32 %v300, %v1033
        %v1066 = vmul.f32 %v301, %v1034
        %v1067 = vmul.f32 %v302, %v1035
        %v1068 = vmul.f32 %v303, %v1036
        %v1069 = vmul.f32 %v304, %v1037
        %v1070 = vmul.f32 %v305, %v1038
        %v1071 = vmul.f32 %v306, %v1039
        %v1072 = vmul.f32 %v307, %v1040
        %v1073 = vmul.f32 %v308, %v1041
        %v1074 = vmul.f32 %v309, %v1042
        %v1075 = vmul.f32 %v310, %v1043
        %v1076 = vmul.f32 %v311, %v1044
        %v1077 = vmul.f32 %v312, %v1045
        %v1078 = vmul.f32 %v313, %v1046
        %v1079 = vmul.f32 %v314, %v1047
        %v1080 = vmul.f32 %v315, %v1048
        %v1081 = vmul.f32 %v316, %v1049
        %v1082 = vmul.f32 %v317, %v1050
        %v1083 = vmul.f32 %v318, %v1051
        %v1084 = vpack.c.bf16 %v1053, %v1052
        %v1085 = vpack.c.bf16 %v1055, %v1054
        %v1086 = vpack.c.bf16 %v1057, %v1056
        %v1087 = vpack.c.bf16 %v1059, %v1058
        %v1088 = vpack.c.bf16 %v1061, %v1060
        %v1089 = vpack.c.bf16 %v1063, %v1062
        %v1090 = vpack.c.bf16 %v1065, %v1064
        %v1091 = vpack.c.bf16 %v1067, %v1066
        %v1092 = vpack.c.bf16 %v1069, %v1068
        %v1093 = vpack.c.bf16 %v1071, %v1070
        %v1094 = vpack.c.bf16 %v1073, %v1072
        %v1095 = vpack.c.bf16 %v1075, %v1074
        %v1096 = vpack.c.bf16 %v1077, %v1076
        %v1097 = vpack.c.bf16 %v1079, %v1078
        %v1098 = vpack.c.bf16 %v1081, %v1080
        %v1099 = vpack.c.bf16 %v1083, %v1082
        %s1100 = scalar_lea.vmem [#allocation7], 256
        %v1101 = vld [vmem:[%s1100] sm:$0xf]
        %v1102 = vld [vmem:[%s1100 + $0x4] sm:$0xf]
        %v1103 = vld [vmem:[%s1100 + $0x8] sm:$0xf]
        %v1104 = vld [vmem:[%s1100 + $0xc] sm:$0xf]
        %v1105 = vld [vmem:[%s1100 + $0x10] sm:$0xf]
        %v1106 = vld [vmem:[%s1100 + $0x14] sm:$0xf]
        %v1107 = vld [vmem:[%s1100 + $0x18] sm:$0xf]
        %v1108 = vld [vmem:[%s1100 + $0x1c] sm:$0xf]
        %v1109 = vld [vmem:[%s1100 + $0x20] sm:$0xf]
        %v1110 = vld [vmem:[%s1100 + $0x24] sm:$0xf]
        %v1111 = vld [vmem:[%s1100 + $0x28] sm:$0xf]
        %v1112 = vld [vmem:[%s1100 + $0x2c] sm:$0xf]
        %v1113 = vld [vmem:[%s1100 + $0x30] sm:$0xf]
        %v1114 = vld [vmem:[%s1100 + $0x34] sm:$0xf]
        %v1115 = vld [vmem:[%s1100 + $0x38] sm:$0xf]
        %v1116 = vld [vmem:[%s1100 + $0x3c] sm:$0xf]
        %s1117 = scalar_lea.vmem [#allocation7], 128
        %v1118 = vld [vmem:[%s1117] sm:$0xf]
        %v1119 = vld [vmem:[%s1117 + $0x4] sm:$0xf]
        %v1120 = vld [vmem:[%s1117 + $0x8] sm:$0xf]
        %v1121 = vld [vmem:[%s1117 + $0xc] sm:$0xf]
        %v1122 = vld [vmem:[%s1117 + $0x10] sm:$0xf]
        %v1123 = vld [vmem:[%s1117 + $0x14] sm:$0xf]
        %v1124 = vld [vmem:[%s1117 + $0x18] sm:$0xf]
        %v1125 = vld [vmem:[%s1117 + $0x1c] sm:$0xf]
        %v1126 = vld [vmem:[%s1117 + $0x20] sm:$0xf]
        %v1127 = vld [vmem:[%s1117 + $0x24] sm:$0xf]
        %v1128 = vld [vmem:[%s1117 + $0x28] sm:$0xf]
        %v1129 = vld [vmem:[%s1117 + $0x2c] sm:$0xf]
        %v1130 = vld [vmem:[%s1117 + $0x30] sm:$0xf]
        %v1131 = vld [vmem:[%s1117 + $0x34] sm:$0xf]
        %v1132 = vld [vmem:[%s1117 + $0x38] sm:$0xf]
        %v1133 = vld [vmem:[%s1117 + $0x3c] sm:$0xf]
        %v1134 = vld [vmem:[#allocation8 + $0x2] sm:$0x1]
        %v1135 = vlaneseq
        %v1136 = vshrl.u32 %v1135, 7
        %v1137 = vsub.s32 0, %v1136
        %v1138 = vrot.slane %v1134, %v1137
        %v1155 = vunpack.c.l.b16 %v1118
        %v1156 = vunpack.c.l.b16 %v1119
        %v1157 = vunpack.c.l.b16 %v1120
        %v1158 = vunpack.c.l.b16 %v1121
        %v1159 = vunpack.c.l.b16 %v1122
        %v1160 = vunpack.c.l.b16 %v1123
        %v1161 = vunpack.c.l.b16 %v1124
        %v1162 = vunpack.c.l.b16 %v1125
        %v1163 = vunpack.c.l.b16 %v1126
        %v1164 = vunpack.c.l.b16 %v1127
        %v1165 = vunpack.c.l.b16 %v1128
        %v1166 = vunpack.c.l.b16 %v1129
        %v1167 = vunpack.c.l.b16 %v1130
        %v1168 = vunpack.c.l.b16 %v1131
        %v1169 = vunpack.c.l.b16 %v1132
        %v1170 = vunpack.c.l.b16 %v1133
        %v1171 = vpack.c.b16 %v1156, %v1155
        %v1172 = vpack.c.b16 %v1158, %v1157
        %v1173 = vpack.c.b16 %v1160, %v1159
        %v1174 = vpack.c.b16 %v1162, %v1161
        %v1175 = vpack.c.b16 %v1164, %v1163
        %v1176 = vpack.c.b16 %v1166, %v1165
        %v1177 = vpack.c.b16 %v1168, %v1167
        %v1178 = vpack.c.b16 %v1170, %v1169
        %1187 = vmatprep.subr.bf16.mxu0 0
        %1188 = vmatpush1.bf16.msra.mxu0 %v1178
        %1189 = vmatprep.subr.bf16.mxu0 0
        %1190 = vmatpush1.bf16.msra.mxu0 %v1177
        %1191 = vmatprep.subr.bf16.mxu0 0
        %1192 = vmatpush1.bf16.msra.mxu0 %v1176
        %1193 = vmatprep.subr.bf16.mxu0 0
        %1194 = vmatpush1.bf16.msra.mxu0 %v1175
        %1195 = vmatprep.subr.bf16.mxu0 0
        %1196 = vmatpush1.bf16.msra.mxu0 %v1174
        %1197 = vmatprep.subr.bf16.mxu0 0
        %1198 = vmatpush1.bf16.msra.mxu0 %v1173
        %1199 = vmatprep.subr.bf16.mxu0 0
        %1200 = vmatpush1.bf16.msra.mxu0 %v1172
        %1201 = vmatprep.subr.bf16.mxu0 0
        %1202 = vmatpush1.bf16.msra.mxu0 %v1171
        %1203 = vmatprep.subr.bf16.mxu0 0
        %1204 = vmatpush2.bf16.msra.mxu0 0
        %1205 = vmatprep.subr.bf16.mxu0 0
        %1206 = vmatpush2.bf16.msra.mxu0 0
        %1207 = vmatprep.subr.bf16.mxu0 0
        %1208 = vmatpush2.bf16.msra.mxu0 0
        %1209 = vmatprep.subr.bf16.mxu0 0
        %1210 = vmatpush2.bf16.msra.mxu0 0
        %1211 = vmatprep.subr.bf16.mxu0 0
        %1212 = vmatpush2.bf16.msra.mxu0 0
        %1213 = vmatprep.subr.bf16.mxu0 0
        %1214 = vmatpush2.bf16.msra.mxu0 0
        %1215 = vmatprep.subr.bf16.mxu0 0
        %1216 = vmatpush2.bf16.msra.mxu0 0
        %1217 = vmatprep.subr.bf16.mxu0 0
        %1218 = vmatpush2.bf16.msra.mxu0 0
        %1219 = vmatprep.mubr.bf16.mxu0 0
        %1220 = vmatmul.mubr.bf16.gmra.mxu0 %v351
        %v1221 = vpop.f32.mrf.mxu0
        %v1222 = vadd.f32 %v1138, %v1221
        %v1223 = vpop.f32.mrf.mxu0
        %v1224 = vpop.f32.mrf.mxu0
        %v1225 = vadd.f32 %v1138, %v1224
        %v1226 = vpop.f32.mrf.mxu0
        %1227 = vmatprep.mubr.bf16.mxu0 0
        %1228 = vmatmul.mubr.bf16.gmra.mxu0 %v352
        %v1229 = vpop.f32.mrf.mxu0
        %v1230 = vadd.f32 %v1138, %v1229
        %v1231 = vpop.f32.mrf.mxu0
        %v1232 = vpop.f32.mrf.mxu0
        %v1233 = vadd.f32 %v1138, %v1232
        %v1234 = vpop.f32.mrf.mxu0
        %1235 = vmatprep.mubr.bf16.mxu0 0
        %1236 = vmatmul.mubr.bf16.gmra.mxu0 %v353
        %v1237 = vpop.f32.mrf.mxu0
        %v1238 = vadd.f32 %v1138, %v1237
        %v1239 = vpop.f32.mrf.mxu0
        %v1240 = vpop.f32.mrf.mxu0
        %v1241 = vadd.f32 %v1138, %v1240
        %v1242 = vpop.f32.mrf.mxu0
        %1243 = vmatprep.mubr.bf16.mxu0 0
        %1244 = vmatmul.mubr.bf16.gmra.mxu0 %v354
        %v1245 = vpop.f32.mrf.mxu0
        %v1246 = vadd.f32 %v1138, %v1245
        %v1247 = vpop.f32.mrf.mxu0
        %v1248 = vpop.f32.mrf.mxu0
        %v1249 = vadd.f32 %v1138, %v1248
        %v1250 = vpop.f32.mrf.mxu0
        %1251 = vmatprep.mubr.bf16.mxu0 0
        %1252 = vmatmul.mubr.bf16.gmra.mxu0 %v355
        %v1253 = vpop.f32.mrf.mxu0
        %v1254 = vadd.f32 %v1138, %v1253
        %v1255 = vpop.f32.mrf.mxu0
        %v1256 = vpop.f32.mrf.mxu0
        %v1257 = vadd.f32 %v1138, %v1256
        %v1258 = vpop.f32.mrf.mxu0
        %1259 = vmatprep.mubr.bf16.mxu0 0
        %1260 = vmatmul.mubr.bf16.gmra.mxu0 %v356
        %v1261 = vpop.f32.mrf.mxu0
        %v1262 = vadd.f32 %v1138, %v1261
        %v1263 = vpop.f32.mrf.mxu0
        %v1264 = vpop.f32.mrf.mxu0
        %v1265 = vadd.f32 %v1138, %v1264
        %v1266 = vpop.f32.mrf.mxu0
        %1267 = vmatprep.mubr.bf16.mxu0 0
        %1268 = vmatmul.mubr.bf16.gmra.mxu0 %v357
        %v1269 = vpop.f32.mrf.mxu0
        %v1270 = vadd.f32 %v1138, %v1269
        %v1271 = vpop.f32.mrf.mxu0
        %v1272 = vpop.f32.mrf.mxu0
        %v1273 = vadd.f32 %v1138, %v1272
        %v1274 = vpop.f32.mrf.mxu0
        %1275 = vmatprep.mubr.bf16.mxu0 0
        %1276 = vmatmul.mubr.bf16.gmra.mxu0 %v358
        %v1277 = vpop.f32.mrf.mxu0
        %v1278 = vadd.f32 %v1138, %v1277
        %v1279 = vpop.f32.mrf.mxu0
        %v1280 = vpop.f32.mrf.mxu0
        %v1281 = vadd.f32 %v1138, %v1280
        %v1282 = vpop.f32.mrf.mxu0
        %1283 = vmatprep.mubr.bf16.mxu0 0
        %1284 = vmatmul.mubr.bf16.gmra.mxu0 %v359
        %v1285 = vpop.f32.mrf.mxu0
        %v1286 = vadd.f32 %v1138, %v1285
        %v1287 = vpop.f32.mrf.mxu0
        %v1288 = vpop.f32.mrf.mxu0
        %v1289 = vadd.f32 %v1138, %v1288
        %v1290 = vpop.f32.mrf.mxu0
        %1291 = vmatprep.mubr.bf16.mxu0 0
        %1292 = vmatmul.mubr.bf16.gmra.mxu0 %v360
        %v1293 = vpop.f32.mrf.mxu0
        %v1294 = vadd.f32 %v1138, %v1293
        %v1295 = vpop.f32.mrf.mxu0
        %v1296 = vpop.f32.mrf.mxu0
        %v1297 = vadd.f32 %v1138, %v1296
        %v1298 = vpop.f32.mrf.mxu0
        %1299 = vmatprep.mubr.bf16.mxu0 0
        %1300 = vmatmul.mubr.bf16.gmra.mxu0 %v361
        %v1301 = vpop.f32.mrf.mxu0
        %v1302 = vadd.f32 %v1138, %v1301
        %v1303 = vpop.f32.mrf.mxu0
        %v1304 = vpop.f32.mrf.mxu0
        %v1305 = vadd.f32 %v1138, %v1304
        %v1306 = vpop.f32.mrf.mxu0
        %1307 = vmatprep.mubr.bf16.mxu0 0
        %1308 = vmatmul.mubr.bf16.gmra.mxu0 %v362
        %v1309 = vpop.f32.mrf.mxu0
        %v1310 = vadd.f32 %v1138, %v1309
        %v1311 = vpop.f32.mrf.mxu0
        %v1312 = vpop.f32.mrf.mxu0
        %v1313 = vadd.f32 %v1138, %v1312
        %v1314 = vpop.f32.mrf.mxu0
        %1315 = vmatprep.mubr.bf16.mxu0 0
        %1316 = vmatmul.mubr.bf16.gmra.mxu0 %v363
        %v1317 = vpop.f32.mrf.mxu0
        %v1318 = vadd.f32 %v1138, %v1317
        %v1319 = vpop.f32.mrf.mxu0
        %v1320 = vpop.f32.mrf.mxu0
        %v1321 = vadd.f32 %v1138, %v1320
        %v1322 = vpop.f32.mrf.mxu0
        %1323 = vmatprep.mubr.bf16.mxu0 0
        %1324 = vmatmul.mubr.bf16.gmra.mxu0 %v364
        %v1325 = vpop.f32.mrf.mxu0
        %v1326 = vadd.f32 %v1138, %v1325
        %v1327 = vpop.f32.mrf.mxu0
        %v1328 = vpop.f32.mrf.mxu0
        %v1329 = vadd.f32 %v1138, %v1328
        %v1330 = vpop.f32.mrf.mxu0
        %1331 = vmatprep.mubr.bf16.mxu0 0
        %1332 = vmatmul.mubr.bf16.gmra.mxu0 %v365
        %v1333 = vpop.f32.mrf.mxu0
        %v1334 = vadd.f32 %v1138, %v1333
        %v1335 = vpop.f32.mrf.mxu0
        %v1336 = vpop.f32.mrf.mxu0
        %v1337 = vadd.f32 %v1138, %v1336
        %v1338 = vpop.f32.mrf.mxu0
        %1339 = vmatprep.mubr.bf16.mxu0 0
        %1340 = vmatmul.mubr.bf16.gmra.mxu0 %v366
        %v1341 = vpop.f32.mrf.mxu0
        %v1342 = vadd.f32 %v1138, %v1341
        %v1343 = vpop.f32.mrf.mxu0
        %v1344 = vpop.f32.mrf.mxu0
        %v1345 = vadd.f32 %v1138, %v1344
        %v1346 = vpop.f32.mrf.mxu0
        %1347 = vdwg.mxu0
        %v1348 = vmax.f32 %v1222, 0.0
        %v1349 = vmax.f32 %v1225, 0.0
        %v1350 = vmax.f32 %v1230, 0.0
        %v1351 = vmax.f32 %v1233, 0.0
        %v1352 = vmax.f32 %v1238, 0.0
        %v1353 = vmax.f32 %v1241, 0.0
        %v1354 = vmax.f32 %v1246, 0.0
        %v1355 = vmax.f32 %v1249, 0.0
        %v1356 = vmax.f32 %v1254, 0.0
        %v1357 = vmax.f32 %v1257, 0.0
        %v1358 = vmax.f32 %v1262, 0.0
        %v1359 = vmax.f32 %v1265, 0.0
        %v1360 = vmax.f32 %v1270, 0.0
        %v1361 = vmax.f32 %v1273, 0.0
        %v1362 = vmax.f32 %v1278, 0.0
        %v1363 = vmax.f32 %v1281, 0.0
        %v1364 = vmax.f32 %v1286, 0.0
        %v1365 = vmax.f32 %v1289, 0.0
        %v1366 = vmax.f32 %v1294, 0.0
        %v1367 = vmax.f32 %v1297, 0.0
        %v1368 = vmax.f32 %v1302, 0.0
        %v1369 = vmax.f32 %v1305, 0.0
        %v1370 = vmax.f32 %v1310, 0.0
        %v1371 = vmax.f32 %v1313, 0.0
        %v1372 = vmax.f32 %v1318, 0.0
        %v1373 = vmax.f32 %v1321, 0.0
        %v1374 = vmax.f32 %v1326, 0.0
        %v1375 = vmax.f32 %v1329, 0.0
        %v1376 = vmax.f32 %v1334, 0.0
        %v1377 = vmax.f32 %v1337, 0.0
        %v1378 = vmax.f32 %v1342, 0.0
        %v1379 = vmax.f32 %v1345, 0.0
        %v1380 = vpack.c.bf16 %v1349, %v1348
        %v1381 = vpack.c.bf16 %v1351, %v1350
        %v1382 = vpack.c.bf16 %v1353, %v1352
        %v1383 = vpack.c.bf16 %v1355, %v1354
        %v1384 = vpack.c.bf16 %v1357, %v1356
        %v1385 = vpack.c.bf16 %v1359, %v1358
        %v1386 = vpack.c.bf16 %v1361, %v1360
        %v1387 = vpack.c.bf16 %v1363, %v1362
        %v1388 = vpack.c.bf16 %v1365, %v1364
        %v1389 = vpack.c.bf16 %v1367, %v1366
        %v1390 = vpack.c.bf16 %v1369, %v1368
        %v1391 = vpack.c.bf16 %v1371, %v1370
        %v1392 = vpack.c.bf16 %v1373, %v1372
        %v1393 = vpack.c.bf16 %v1375, %v1374
        %v1394 = vpack.c.bf16 %v1377, %v1376
        %v1395 = vpack.c.bf16 %v1379, %v1378
        %s1396 = scalar_lea.vmem [#allocation7], 192
        %v1397 = vld [vmem:[%s1396] sm:$0xf]
        %v1398 = vld [vmem:[%s1396 + $0x4] sm:$0xf]
        %v1399 = vld [vmem:[%s1396 + $0x8] sm:$0xf]
        %v1400 = vld [vmem:[%s1396 + $0xc] sm:$0xf]
        %v1401 = vld [vmem:[%s1396 + $0x10] sm:$0xf]
        %v1402 = vld [vmem:[%s1396 + $0x14] sm:$0xf]
        %v1403 = vld [vmem:[%s1396 + $0x18] sm:$0xf]
        %v1404 = vld [vmem:[%s1396 + $0x1c] sm:$0xf]
        %v1405 = vld [vmem:[%s1396 + $0x20] sm:$0xf]
        %v1406 = vld [vmem:[%s1396 + $0x24] sm:$0xf]
        %v1407 = vld [vmem:[%s1396 + $0x28] sm:$0xf]
        %v1408 = vld [vmem:[%s1396 + $0x2c] sm:$0xf]
        %v1409 = vld [vmem:[%s1396 + $0x30] sm:$0xf]
        %v1410 = vld [vmem:[%s1396 + $0x34] sm:$0xf]
        %v1411 = vld [vmem:[%s1396 + $0x38] sm:$0xf]
        %v1412 = vld [vmem:[%s1396 + $0x3c] sm:$0xf]
        %v1413 = vld [vmem:[#allocation8 + $0x3] sm:$0x1]
        %v1414 = vlaneseq
        %v1415 = vshrl.u32 %v1414, 7
        %v1416 = vsub.s32 0, %v1415
        %v1417 = vrot.slane %v1413, %v1416
        %v1434 = vunpack.c.l.b16 %v1397
        %v1435 = vunpack.c.l.b16 %v1398
        %v1436 = vunpack.c.l.b16 %v1399
        %v1437 = vunpack.c.l.b16 %v1400
        %v1438 = vunpack.c.l.b16 %v1401
        %v1439 = vunpack.c.l.b16 %v1402
        %v1440 = vunpack.c.l.b16 %v1403
        %v1441 = vunpack.c.l.b16 %v1404
        %v1442 = vunpack.c.l.b16 %v1405
        %v1443 = vunpack.c.l.b16 %v1406
        %v1444 = vunpack.c.l.b16 %v1407
        %v1445 = vunpack.c.l.b16 %v1408
        %v1446 = vunpack.c.l.b16 %v1409
        %v1447 = vunpack.c.l.b16 %v1410
        %v1448 = vunpack.c.l.b16 %v1411
        %v1449 = vunpack.c.l.b16 %v1412
        %v1450 = vpack.c.b16 %v1435, %v1434
        %v1451 = vpack.c.b16 %v1437, %v1436
        %v1452 = vpack.c.b16 %v1439, %v1438
        %v1453 = vpack.c.b16 %v1441, %v1440
        %v1454 = vpack.c.b16 %v1443, %v1442
        %v1455 = vpack.c.b16 %v1445, %v1444
        %v1456 = vpack.c.b16 %v1447, %v1446
        %v1457 = vpack.c.b16 %v1449, %v1448
        %1466 = vmatprep.subr.bf16.mxu0 0
        %1467 = vmatpush1.bf16.msra.mxu0 %v1457
        %1468 = vmatprep.subr.bf16.mxu0 0
        %1469 = vmatpush1.bf16.msra.mxu0 %v1456
        %1470 = vmatprep.subr.bf16.mxu0 0
        %1471 = vmatpush1.bf16.msra.mxu0 %v1455
        %1472 = vmatprep.subr.bf16.mxu0 0
        %1473 = vmatpush1.bf16.msra.mxu0 %v1454
        %1474 = vmatprep.subr.bf16.mxu0 0
        %1475 = vmatpush1.bf16.msra.mxu0 %v1453
        %1476 = vmatprep.subr.bf16.mxu0 0
        %1477 = vmatpush1.bf16.msra.mxu0 %v1452
        %1478 = vmatprep.subr.bf16.mxu0 0
        %1479 = vmatpush1.bf16.msra.mxu0 %v1451
        %1480 = vmatprep.subr.bf16.mxu0 0
        %1481 = vmatpush1.bf16.msra.mxu0 %v1450
        %1482 = vmatprep.subr.bf16.mxu0 0
        %1483 = vmatpush2.bf16.msra.mxu0 0
        %1484 = vmatprep.subr.bf16.mxu0 0
        %1485 = vmatpush2.bf16.msra.mxu0 0
        %1486 = vmatprep.subr.bf16.mxu0 0
        %1487 = vmatpush2.bf16.msra.mxu0 0
        %1488 = vmatprep.subr.bf16.mxu0 0
        %1489 = vmatpush2.bf16.msra.mxu0 0
        %1490 = vmatprep.subr.bf16.mxu0 0
        %1491 = vmatpush2.bf16.msra.mxu0 0
        %1492 = vmatprep.subr.bf16.mxu0 0
        %1493 = vmatpush2.bf16.msra.mxu0 0
        %1494 = vmatprep.subr.bf16.mxu0 0
        %1495 = vmatpush2.bf16.msra.mxu0 0
        %1496 = vmatprep.subr.bf16.mxu0 0
        %1497 = vmatpush2.bf16.msra.mxu0 0
        %1498 = vmatprep.mubr.bf16.mxu0 0
        %1499 = vmatmul.mubr.bf16.gmra.mxu0 %v1380
        %v1500 = vpop.f32.mrf.mxu0
        %v1501 = vadd.f32 %v1417, %v1500
        %v1502 = vpop.f32.mrf.mxu0
        %v1503 = vpop.f32.mrf.mxu0
        %v1504 = vadd.f32 %v1417, %v1503
        %v1505 = vpop.f32.mrf.mxu0
        %1506 = vmatprep.mubr.bf16.mxu0 0
        %1507 = vmatmul.mubr.bf16.gmra.mxu0 %v1381
        %v1508 = vpop.f32.mrf.mxu0
        %v1509 = vadd.f32 %v1417, %v1508
        %v1510 = vpop.f32.mrf.mxu0
        %v1511 = vpop.f32.mrf.mxu0
        %v1512 = vadd.f32 %v1417, %v1511
        %v1513 = vpop.f32.mrf.mxu0
        %1514 = vmatprep.mubr.bf16.mxu0 0
        %1515 = vmatmul.mubr.bf16.gmra.mxu0 %v1382
        %v1516 = vpop.f32.mrf.mxu0
        %v1517 = vadd.f32 %v1417, %v1516
        %v1518 = vpop.f32.mrf.mxu0
        %v1519 = vpop.f32.mrf.mxu0
        %v1520 = vadd.f32 %v1417, %v1519
        %v1521 = vpop.f32.mrf.mxu0
        %1522 = vmatprep.mubr.bf16.mxu0 0
        %1523 = vmatmul.mubr.bf16.gmra.mxu0 %v1383
        %v1524 = vpop.f32.mrf.mxu0
        %v1525 = vadd.f32 %v1417, %v1524
        %v1526 = vpop.f32.mrf.mxu0
        %v1527 = vpop.f32.mrf.mxu0
        %v1528 = vadd.f32 %v1417, %v1527
        %v1529 = vpop.f32.mrf.mxu0
        %1530 = vmatprep.mubr.bf16.mxu0 0
        %1531 = vmatmul.mubr.bf16.gmra.mxu0 %v1384
        %v1532 = vpop.f32.mrf.mxu0
        %v1533 = vadd.f32 %v1417, %v1532
        %v1534 = vpop.f32.mrf.mxu0
        %v1535 = vpop.f32.mrf.mxu0
        %v1536 = vadd.f32 %v1417, %v1535
        %v1537 = vpop.f32.mrf.mxu0
        %1538 = vmatprep.mubr.bf16.mxu0 0
        %1539 = vmatmul.mubr.bf16.gmra.mxu0 %v1385
        %v1540 = vpop.f32.mrf.mxu0
        %v1541 = vadd.f32 %v1417, %v1540
        %v1542 = vpop.f32.mrf.mxu0
        %v1543 = vpop.f32.mrf.mxu0
        %v1544 = vadd.f32 %v1417, %v1543
        %v1545 = vpop.f32.mrf.mxu0
        %1546 = vmatprep.mubr.bf16.mxu0 0
        %1547 = vmatmul.mubr.bf16.gmra.mxu0 %v1386
        %v1548 = vpop.f32.mrf.mxu0
        %v1549 = vadd.f32 %v1417, %v1548
        %v1550 = vpop.f32.mrf.mxu0
        %v1551 = vpop.f32.mrf.mxu0
        %v1552 = vadd.f32 %v1417, %v1551
        %v1553 = vpop.f32.mrf.mxu0
        %1554 = vmatprep.mubr.bf16.mxu0 0
        %1555 = vmatmul.mubr.bf16.gmra.mxu0 %v1387
        %v1556 = vpop.f32.mrf.mxu0
        %v1557 = vadd.f32 %v1417, %v1556
        %v1558 = vpop.f32.mrf.mxu0
        %v1559 = vpop.f32.mrf.mxu0
        %v1560 = vadd.f32 %v1417, %v1559
        %v1561 = vpop.f32.mrf.mxu0
        %1562 = vmatprep.mubr.bf16.mxu0 0
        %1563 = vmatmul.mubr.bf16.gmra.mxu0 %v1388
        %v1564 = vpop.f32.mrf.mxu0
        %v1565 = vadd.f32 %v1417, %v1564
        %v1566 = vpop.f32.mrf.mxu0
        %v1567 = vpop.f32.mrf.mxu0
        %v1568 = vadd.f32 %v1417, %v1567
        %v1569 = vpop.f32.mrf.mxu0
        %1570 = vmatprep.mubr.bf16.mxu0 0
        %1571 = vmatmul.mubr.bf16.gmra.mxu0 %v1389
        %v1572 = vpop.f32.mrf.mxu0
        %v1573 = vadd.f32 %v1417, %v1572
        %v1574 = vpop.f32.mrf.mxu0
        %v1575 = vpop.f32.mrf.mxu0
        %v1576 = vadd.f32 %v1417, %v1575
        %v1577 = vpop.f32.mrf.mxu0
        %1578 = vmatprep.mubr.bf16.mxu0 0
        %1579 = vmatmul.mubr.bf16.gmra.mxu0 %v1390
        %v1580 = vpop.f32.mrf.mxu0
        %v1581 = vadd.f32 %v1417, %v1580
        %v1582 = vpop.f32.mrf.mxu0
        %v1583 = vpop.f32.mrf.mxu0
        %v1584 = vadd.f32 %v1417, %v1583
        %v1585 = vpop.f32.mrf.mxu0
        %1586 = vmatprep.mubr.bf16.mxu0 0
        %1587 = vmatmul.mubr.bf16.gmra.mxu0 %v1391
        %v1588 = vpop.f32.mrf.mxu0
        %v1589 = vadd.f32 %v1417, %v1588
        %v1590 = vpop.f32.mrf.mxu0
        %v1591 = vpop.f32.mrf.mxu0
        %v1592 = vadd.f32 %v1417, %v1591
        %v1593 = vpop.f32.mrf.mxu0
        %1594 = vmatprep.mubr.bf16.mxu0 0
        %1595 = vmatmul.mubr.bf16.gmra.mxu0 %v1392
        %v1596 = vpop.f32.mrf.mxu0
        %v1597 = vadd.f32 %v1417, %v1596
        %v1598 = vpop.f32.mrf.mxu0
        %v1599 = vpop.f32.mrf.mxu0
        %v1600 = vadd.f32 %v1417, %v1599
        %v1601 = vpop.f32.mrf.mxu0
        %1602 = vmatprep.mubr.bf16.mxu0 0
        %1603 = vmatmul.mubr.bf16.gmra.mxu0 %v1393
        %v1604 = vpop.f32.mrf.mxu0
        %v1605 = vadd.f32 %v1417, %v1604
        %v1606 = vpop.f32.mrf.mxu0
        %v1607 = vpop.f32.mrf.mxu0
        %v1608 = vadd.f32 %v1417, %v1607
        %v1609 = vpop.f32.mrf.mxu0
        %1610 = vmatprep.mubr.bf16.mxu0 0
        %1611 = vmatmul.mubr.bf16.gmra.mxu0 %v1394
        %v1612 = vpop.f32.mrf.mxu0
        %v1613 = vadd.f32 %v1417, %v1612
        %v1614 = vpop.f32.mrf.mxu0
        %v1615 = vpop.f32.mrf.mxu0
        %v1616 = vadd.f32 %v1417, %v1615
        %v1617 = vpop.f32.mrf.mxu0
        %1618 = vmatprep.mubr.bf16.mxu0 0
        %1619 = vmatmul.mubr.bf16.gmra.mxu0 %v1395
        %v1620 = vpop.f32.mrf.mxu0
        %v1621 = vadd.f32 %v1417, %v1620
        %v1622 = vpop.f32.mrf.mxu0
        %v1623 = vpop.f32.mrf.mxu0
        %v1624 = vadd.f32 %v1417, %v1623
        %v1625 = vpop.f32.mrf.mxu0
        %1626 = vdwg.mxu0
        %v1627 = vmul.f32 %v1501, %v319
        %v1628 = vmul.f32 %v1504, %v320
        %v1629 = vmul.f32 %v1509, %v321
        %v1630 = vmul.f32 %v1512, %v322
        %v1631 = vmul.f32 %v1517, %v323
        %v1632 = vmul.f32 %v1520, %v324
        %v1633 = vmul.f32 %v1525, %v325
        %v1634 = vmul.f32 %v1528, %v326
        %v1635 = vmul.f32 %v1533, %v327
        %v1636 = vmul.f32 %v1536, %v328
        %v1637 = vmul.f32 %v1541, %v329
        %v1638 = vmul.f32 %v1544, %v330
        %v1639 = vmul.f32 %v1549, %v331
        %v1640 = vmul.f32 %v1552, %v332
        %v1641 = vmul.f32 %v1557, %v333
        %v1642 = vmul.f32 %v1560, %v334
        %v1643 = vmul.f32 %v1565, %v335
        %v1644 = vmul.f32 %v1568, %v336
        %v1645 = vmul.f32 %v1573, %v337
        %v1646 = vmul.f32 %v1576, %v338
        %v1647 = vmul.f32 %v1581, %v339
        %v1648 = vmul.f32 %v1584, %v340
        %v1649 = vmul.f32 %v1589, %v341
        %v1650 = vmul.f32 %v1592, %v342
        %v1651 = vmul.f32 %v1597, %v343
        %v1652 = vmul.f32 %v1600, %v344
        %v1653 = vmul.f32 %v1605, %v345
        %v1654 = vmul.f32 %v1608, %v346
        %v1655 = vmul.f32 %v1613, %v347
        %v1656 = vmul.f32 %v1616, %v348
        %v1657 = vmul.f32 %v1621, %v349
        %v1658 = vmul.f32 %v1624, %v350
        %1659 = vadd.xlane.f32.xlu0 %v1627
        %v1660 = vpop.xlane.xlu0 %1659
        %1661 = vadd.xlane.f32.xlu0 %v1628
        %v1662 = vpop.xlane.xlu0 %1661
        %1663 = vadd.xlane.f32.xlu0 %v1629
        %v1664 = vpop.xlane.xlu0 %1663
        %1665 = vadd.xlane.f32.xlu0 %v1630
        %v1666 = vpop.xlane.xlu0 %1665
        %1667 = vadd.xlane.f32.xlu0 %v1631
        %v1668 = vpop.xlane.xlu0 %1667
        %1669 = vadd.xlane.f32.xlu0 %v1632
        %v1670 = vpop.xlane.xlu0 %1669
        %1671 = vadd.xlane.f32.xlu0 %v1633
        %v1672 = vpop.xlane.xlu0 %1671
        %1673 = vadd.xlane.f32.xlu0 %v1634
        %v1674 = vpop.xlane.xlu0 %1673
        %1675 = vadd.xlane.f32.xlu0 %v1635
        %v1676 = vpop.xlane.xlu0 %1675
        %1677 = vadd.xlane.f32.xlu0 %v1636
        %v1678 = vpop.xlane.xlu0 %1677
        %1679 = vadd.xlane.f32.xlu0 %v1637
        %v1680 = vpop.xlane.xlu0 %1679
        %1681 = vadd.xlane.f32.xlu0 %v1638
        %v1682 = vpop.xlane.xlu0 %1681
        %1683 = vadd.xlane.f32.xlu0 %v1639
        %v1684 = vpop.xlane.xlu0 %1683
        %1685 = vadd.xlane.f32.xlu0 %v1640
        %v1686 = vpop.xlane.xlu0 %1685
        %1687 = vadd.xlane.f32.xlu0 %v1641
        %v1688 = vpop.xlane.xlu0 %1687
        %1689 = vadd.xlane.f32.xlu0 %v1642
        %v1690 = vpop.xlane.xlu0 %1689
        %1691 = vadd.xlane.f32.xlu0 %v1643
        %v1692 = vpop.xlane.xlu0 %1691
        %1693 = vadd.xlane.f32.xlu0 %v1644
        %v1694 = vpop.xlane.xlu0 %1693
        %1695 = vadd.xlane.f32.xlu0 %v1645
        %v1696 = vpop.xlane.xlu0 %1695
        %1697 = vadd.xlane.f32.xlu0 %v1646
        %v1698 = vpop.xlane.xlu0 %1697
        %1699 = vadd.xlane.f32.xlu0 %v1647
        %v1700 = vpop.xlane.xlu0 %1699
        %1701 = vadd.xlane.f32.xlu0 %v1648
        %v1702 = vpop.xlane.xlu0 %1701
        %1703 = vadd.xlane.f32.xlu0 %v1649
        %v1704 = vpop.xlane.xlu0 %1703
        %1705 = vadd.xlane.f32.xlu0 %v1650
        %v1706 = vpop.xlane.xlu0 %1705
        %1707 = vadd.xlane.f32.xlu0 %v1651
        %v1708 = vpop.xlane.xlu0 %1707
        %1709 = vadd.xlane.f32.xlu0 %v1652
        %v1710 = vpop.xlane.xlu0 %1709
        %1711 = vadd.xlane.f32.xlu0 %v1653
        %v1712 = vpop.xlane.xlu0 %1711
        %1713 = vadd.xlane.f32.xlu0 %v1654
        %v1714 = vpop.xlane.xlu0 %1713
        %1715 = vadd.xlane.f32.xlu0 %v1655
        %v1716 = vpop.xlane.xlu0 %1715
        %1717 = vadd.xlane.f32.xlu0 %v1656
        %v1718 = vpop.xlane.xlu0 %1717
        %1719 = vadd.xlane.f32.xlu0 %v1657
        %v1720 = vpop.xlane.xlu0 %1719
        %1721 = vadd.xlane.f32.xlu0 %v1658
        %v1722 = vpop.xlane.xlu0 %1721
        %v1723 = vtanh.pop %v1660
        %v1724 = vtanh.pop %v1662
        %v1725 = vtanh.pop %v1664
        %v1726 = vtanh.pop %v1666
        %v1727 = vtanh.pop %v1668
        %v1728 = vtanh.pop %v1670
        %v1729 = vtanh.pop %v1672
        %v1730 = vtanh.pop %v1674
        %v1731 = vtanh.pop %v1676
        %v1732 = vtanh.pop %v1678
        %v1733 = vtanh.pop %v1680
        %v1734 = vtanh.pop %v1682
        %v1735 = vtanh.pop %v1684
        %v1736 = vtanh.pop %v1686
        %v1737 = vtanh.pop %v1688
        %v1738 = vtanh.pop %v1690
        %v1739 = vtanh.pop %v1692
        %v1740 = vtanh.pop %v1694
        %v1741 = vtanh.pop %v1696
        %v1742 = vtanh.pop %v1698
        %v1743 = vtanh.pop %v1700
        %v1744 = vtanh.pop %v1702
        %v1745 = vtanh.pop %v1704
        %v1746 = vtanh.pop %v1706
        %v1747 = vtanh.pop %v1708
        %v1748 = vtanh.pop %v1710
        %v1749 = vtanh.pop %v1712
        %v1750 = vtanh.pop %v1714
        %v1751 = vtanh.pop %v1716
        %v1752 = vtanh.pop %v1718
        %v1753 = vtanh.pop %v1720
        %v1754 = vtanh.pop %v1722
        %v1755 = vadd.f32 %v1723, 1.0
        %v1756 = vadd.f32 %v1724, 1.0
        %v1757 = vadd.f32 %v1725, 1.0
        %v1758 = vadd.f32 %v1726, 1.0
        %v1759 = vadd.f32 %v1727, 1.0
        %v1760 = vadd.f32 %v1728, 1.0
        %v1761 = vadd.f32 %v1729, 1.0
        %v1762 = vadd.f32 %v1730, 1.0
        %v1763 = vadd.f32 %v1731, 1.0
        %v1764 = vadd.f32 %v1732, 1.0
        %v1765 = vadd.f32 %v1733, 1.0
        %v1766 = vadd.f32 %v1734, 1.0
        %v1767 = vadd.f32 %v1735, 1.0
        %v1768 = vadd.f32 %v1736, 1.0
        %v1769 = vadd.f32 %v1737, 1.0
        %v1770 = vadd.f32 %v1738, 1.0
        %v1771 = vadd.f32 %v1739, 1.0
        %v1772 = vadd.f32 %v1740, 1.0
        %v1773 = vadd.f32 %v1741, 1.0
        %v1774 = vadd.f32 %v1742, 1.0
        %v1775 = vadd.f32 %v1743, 1.0
        %v1776 = vadd.f32 %v1744, 1.0
        %v1777 = vadd.f32 %v1745, 1.0
        %v1778 = vadd.f32 %v1746, 1.0
        %v1779 = vadd.f32 %v1747, 1.0
        %v1780 = vadd.f32 %v1748, 1.0
        %v1781 = vadd.f32 %v1749, 1.0
        %v1782 = vadd.f32 %v1750, 1.0
        %v1783 = vadd.f32 %v1751, 1.0
        %v1784 = vadd.f32 %v1752, 1.0
        %v1785 = vadd.f32 %v1753, 1.0
        %v1786 = vadd.f32 %v1754, 1.0
        %v1787 = vmul.f32 %v319, %v1755
        %v1788 = vmul.f32 %v320, %v1756
        %v1789 = vmul.f32 %v321, %v1757
        %v1790 = vmul.f32 %v322, %v1758
        %v1791 = vmul.f32 %v323, %v1759
        %v1792 = vmul.f32 %v324, %v1760
        %v1793 = vmul.f32 %v325, %v1761
        %v1794 = vmul.f32 %v326, %v1762
        %v1795 = vmul.f32 %v327, %v1763
        %v1796 = vmul.f32 %v328, %v1764
        %v1797 = vmul.f32 %v329, %v1765
        %v1798 = vmul.f32 %v330, %v1766
        %v1799 = vmul.f32 %v331, %v1767
        %v1800 = vmul.f32 %v332, %v1768
        %v1801 = vmul.f32 %v333, %v1769
        %v1802 = vmul.f32 %v334, %v1770
        %v1803 = vmul.f32 %v335, %v1771
        %v1804 = vmul.f32 %v336, %v1772
        %v1805 = vmul.f32 %v337, %v1773
        %v1806 = vmul.f32 %v338, %v1774
        %v1807 = vmul.f32 %v339, %v1775
        %v1808 = vmul.f32 %v340, %v1776
        %v1809 = vmul.f32 %v341, %v1777
        %v1810 = vmul.f32 %v342, %v1778
        %v1811 = vmul.f32 %v343, %v1779
        %v1812 = vmul.f32 %v344, %v1780
        %v1813 = vmul.f32 %v345, %v1781
        %v1814 = vmul.f32 %v346, %v1782
        %v1815 = vmul.f32 %v347, %v1783
        %v1816 = vmul.f32 %v348, %v1784
        %v1817 = vmul.f32 %v349, %v1785
        %v1818 = vmul.f32 %v350, %v1786
        %v1819 = vpack.c.bf16 %v1788, %v1787
        %v1820 = vpack.c.bf16 %v1790, %v1789
        %v1821 = vpack.c.bf16 %v1792, %v1791
        %v1822 = vpack.c.bf16 %v1794, %v1793
        %v1823 = vpack.c.bf16 %v1796, %v1795
        %v1824 = vpack.c.bf16 %v1798, %v1797
        %v1825 = vpack.c.bf16 %v1800, %v1799
        %v1826 = vpack.c.bf16 %v1802, %v1801
        %v1827 = vpack.c.bf16 %v1804, %v1803
        %v1828 = vpack.c.bf16 %v1806, %v1805
        %v1829 = vpack.c.bf16 %v1808, %v1807
        %v1830 = vpack.c.bf16 %v1810, %v1809
        %v1831 = vpack.c.bf16 %v1812, %v1811
        %v1832 = vpack.c.bf16 %v1814, %v1813
        %v1833 = vpack.c.bf16 %v1816, %v1815
        %v1834 = vpack.c.bf16 %v1818, %v1817
        %s1835 = scalar_lea.vmem [#allocation7], 320
        %v1836 = vld [vmem:[%s1835] sm:$0xf]
        %v1837 = vld [vmem:[%s1835 + $0x4] sm:$0xf]
        %v1838 = vld [vmem:[%s1835 + $0x8] sm:$0xf]
        %v1839 = vld [vmem:[%s1835 + $0xc] sm:$0xf]
        %v1840 = vld [vmem:[%s1835 + $0x10] sm:$0xf]
        %v1841 = vld [vmem:[%s1835 + $0x14] sm:$0xf]
        %v1842 = vld [vmem:[%s1835 + $0x18] sm:$0xf]
        %v1843 = vld [vmem:[%s1835 + $0x1c] sm:$0xf]
        %v1844 = vld [vmem:[%s1835 + $0x20] sm:$0xf]
        %v1845 = vld [vmem:[%s1835 + $0x24] sm:$0xf]
        %v1846 = vld [vmem:[%s1835 + $0x28] sm:$0xf]
        %v1847 = vld [vmem:[%s1835 + $0x2c] sm:$0xf]
        %v1848 = vld [vmem:[%s1835 + $0x30] sm:$0xf]
        %v1849 = vld [vmem:[%s1835 + $0x34] sm:$0xf]
        %v1850 = vld [vmem:[%s1835 + $0x38] sm:$0xf]
        %v1851 = vld [vmem:[%s1835 + $0x3c] sm:$0xf]
        %v1868 = vunpack.c.l.b16 %v1836
        %v1869 = vunpack.c.l.b16 %v1837
        %v1870 = vunpack.c.l.b16 %v1838
        %v1871 = vunpack.c.l.b16 %v1839
        %v1872 = vunpack.c.l.b16 %v1840
        %v1873 = vunpack.c.l.b16 %v1841
        %v1874 = vunpack.c.l.b16 %v1842
        %v1875 = vunpack.c.l.b16 %v1843
        %v1876 = vunpack.c.l.b16 %v1844
        %v1877 = vunpack.c.l.b16 %v1845
        %v1878 = vunpack.c.l.b16 %v1846
        %v1879 = vunpack.c.l.b16 %v1847
        %v1880 = vunpack.c.l.b16 %v1848
        %v1881 = vunpack.c.l.b16 %v1849
        %v1882 = vunpack.c.l.b16 %v1850
        %v1883 = vunpack.c.l.b16 %v1851
        %v1884 = vpack.c.b16 %v1869, %v1868
        %v1885 = vpack.c.b16 %v1871, %v1870
        %v1886 = vpack.c.b16 %v1873, %v1872
        %v1887 = vpack.c.b16 %v1875, %v1874
        %v1888 = vpack.c.b16 %v1877, %v1876
        %v1889 = vpack.c.b16 %v1879, %v1878
        %v1890 = vpack.c.b16 %v1881, %v1880
        %v1891 = vpack.c.b16 %v1883, %v1882
        %1900 = vmatprep.subr.bf16.mxu0 0
        %1901 = vmatpush1.bf16.msra.mxu0 %v1891
        %1902 = vmatprep.subr.bf16.mxu0 0
        %1903 = vmatpush1.bf16.msra.mxu0 %v1890
        %1904 = vmatprep.subr.bf16.mxu0 0
        %1905 = vmatpush1.bf16.msra.mxu0 %v1889
        %1906 = vmatprep.subr.bf16.mxu0 0
        %1907 = vmatpush1.bf16.msra.mxu0 %v1888
        %1908 = vmatprep.subr.bf16.mxu0 0
        %1909 = vmatpush1.bf16.msra.mxu0 %v1887
        %1910 = vmatprep.subr.bf16.mxu0 0
        %1911 = vmatpush1.bf16.msra.mxu0 %v1886
        %1912 = vmatprep.subr.bf16.mxu0 0
        %1913 = vmatpush1.bf16.msra.mxu0 %v1885
        %1914 = vmatprep.subr.bf16.mxu0 0
        %1915 = vmatpush1.bf16.msra.mxu0 %v1884
        %1916 = vmatprep.subr.bf16.mxu0 0
        %1917 = vmatpush2.bf16.msra.mxu0 0
        %1918 = vmatprep.subr.bf16.mxu0 0
        %1919 = vmatpush2.bf16.msra.mxu0 0
        %1920 = vmatprep.subr.bf16.mxu0 0
        %1921 = vmatpush2.bf16.msra.mxu0 0
        %1922 = vmatprep.subr.bf16.mxu0 0
        %1923 = vmatpush2.bf16.msra.mxu0 0
        %1924 = vmatprep.subr.bf16.mxu0 0
        %1925 = vmatpush2.bf16.msra.mxu0 0
        %1926 = vmatprep.subr.bf16.mxu0 0
        %1927 = vmatpush2.bf16.msra.mxu0 0
        %1928 = vmatprep.subr.bf16.mxu0 0
        %1929 = vmatpush2.bf16.msra.mxu0 0
        %1930 = vmatprep.subr.bf16.mxu0 0
        %1931 = vmatpush2.bf16.msra.mxu0 0
        %1932 = vmatprep.mubr.bf16.mxu0 0
        %1933 = vmatmul.mubr.bf16.gmra.mxu0 %v1819
        %v1934 = vpop.f32.mrf.mxu0
        %v1935 = vadd.f32 0.0, %v1934
        %v1936 = vpop.f32.mrf.mxu0
        %v1937 = vpop.f32.mrf.mxu0
        %v1938 = vadd.f32 0.0, %v1937
        %v1939 = vpop.f32.mrf.mxu0
        %1940 = vmatprep.mubr.bf16.mxu0 0
        %1941 = vmatmul.mubr.bf16.gmra.mxu0 %v1820
        %v1942 = vpop.f32.mrf.mxu0
        %v1943 = vadd.f32 0.0, %v1942
        %v1944 = vpop.f32.mrf.mxu0
        %v1945 = vpop.f32.mrf.mxu0
        %v1946 = vadd.f32 0.0, %v1945
        %v1947 = vpop.f32.mrf.mxu0
        %1948 = vmatprep.mubr.bf16.mxu0 0
        %1949 = vmatmul.mubr.bf16.gmra.mxu0 %v1821
        %v1950 = vpop.f32.mrf.mxu0
        %v1951 = vadd.f32 0.0, %v1950
        %v1952 = vpop.f32.mrf.mxu0
        %v1953 = vpop.f32.mrf.mxu0
        %v1954 = vadd.f32 0.0, %v1953
        %v1955 = vpop.f32.mrf.mxu0
        %1956 = vmatprep.mubr.bf16.mxu0 0
        %1957 = vmatmul.mubr.bf16.gmra.mxu0 %v1822
        %v1958 = vpop.f32.mrf.mxu0
        %v1959 = vadd.f32 0.0, %v1958
        %v1960 = vpop.f32.mrf.mxu0
        %v1961 = vpop.f32.mrf.mxu0
        %v1962 = vadd.f32 0.0, %v1961
        %v1963 = vpop.f32.mrf.mxu0
        %1964 = vmatprep.mubr.bf16.mxu0 0
        %1965 = vmatmul.mubr.bf16.gmra.mxu0 %v1823
        %v1966 = vpop.f32.mrf.mxu0
        %v1967 = vadd.f32 0.0, %v1966
        %v1968 = vpop.f32.mrf.mxu0
        %v1969 = vpop.f32.mrf.mxu0
        %v1970 = vadd.f32 0.0, %v1969
        %v1971 = vpop.f32.mrf.mxu0
        %1972 = vmatprep.mubr.bf16.mxu0 0
        %1973 = vmatmul.mubr.bf16.gmra.mxu0 %v1824
        %v1974 = vpop.f32.mrf.mxu0
        %v1975 = vadd.f32 0.0, %v1974
        %v1976 = vpop.f32.mrf.mxu0
        %v1977 = vpop.f32.mrf.mxu0
        %v1978 = vadd.f32 0.0, %v1977
        %v1979 = vpop.f32.mrf.mxu0
        %1980 = vmatprep.mubr.bf16.mxu0 0
        %1981 = vmatmul.mubr.bf16.gmra.mxu0 %v1825
        %v1982 = vpop.f32.mrf.mxu0
        %v1983 = vadd.f32 0.0, %v1982
        %v1984 = vpop.f32.mrf.mxu0
        %v1985 = vpop.f32.mrf.mxu0
        %v1986 = vadd.f32 0.0, %v1985
        %v1987 = vpop.f32.mrf.mxu0
        %1988 = vmatprep.mubr.bf16.mxu0 0
        %1989 = vmatmul.mubr.bf16.gmra.mxu0 %v1826
        %v1990 = vpop.f32.mrf.mxu0
        %v1991 = vadd.f32 0.0, %v1990
        %v1992 = vpop.f32.mrf.mxu0
        %v1993 = vpop.f32.mrf.mxu0
        %v1994 = vadd.f32 0.0, %v1993
        %v1995 = vpop.f32.mrf.mxu0
        %1996 = vmatprep.mubr.bf16.mxu0 0
        %1997 = vmatmul.mubr.bf16.gmra.mxu0 %v1827
        %v1998 = vpop.f32.mrf.mxu0
        %v1999 = vadd.f32 0.0, %v1998
        %v2000 = vpop.f32.mrf.mxu0
        %v2001 = vpop.f32.mrf.mxu0
        %v2002 = vadd.f32 0.0, %v2001
        %v2003 = vpop.f32.mrf.mxu0
        %2004 = vmatprep.mubr.bf16.mxu0 0
        %2005 = vmatmul.mubr.bf16.gmra.mxu0 %v1828
        %v2006 = vpop.f32.mrf.mxu0
        %v2007 = vadd.f32 0.0, %v2006
        %v2008 = vpop.f32.mrf.mxu0
        %v2009 = vpop.f32.mrf.mxu0
        %v2010 = vadd.f32 0.0, %v2009
        %v2011 = vpop.f32.mrf.mxu0
        %2012 = vmatprep.mubr.bf16.mxu0 0
        %2013 = vmatmul.mubr.bf16.gmra.mxu0 %v1829
        %v2014 = vpop.f32.mrf.mxu0
        %v2015 = vadd.f32 0.0, %v2014
        %v2016 = vpop.f32.mrf.mxu0
        %v2017 = vpop.f32.mrf.mxu0
        %v2018 = vadd.f32 0.0, %v2017
        %v2019 = vpop.f32.mrf.mxu0
        %2020 = vmatprep.mubr.bf16.mxu0 0
        %2021 = vmatmul.mubr.bf16.gmra.mxu0 %v1830
        %v2022 = vpop.f32.mrf.mxu0
        %v2023 = vadd.f32 0.0, %v2022
        %v2024 = vpop.f32.mrf.mxu0
        %v2025 = vpop.f32.mrf.mxu0
        %v2026 = vadd.f32 0.0, %v2025
        %v2027 = vpop.f32.mrf.mxu0
        %2028 = vmatprep.mubr.bf16.mxu0 0
        %2029 = vmatmul.mubr.bf16.gmra.mxu0 %v1831
        %v2030 = vpop.f32.mrf.mxu0
        %v2031 = vadd.f32 0.0, %v2030
        %v2032 = vpop.f32.mrf.mxu0
        %v2033 = vpop.f32.mrf.mxu0
        %v2034 = vadd.f32 0.0, %v2033
        %v2035 = vpop.f32.mrf.mxu0
        %2036 = vmatprep.mubr.bf16.mxu0 0
        %2037 = vmatmul.mubr.bf16.gmra.mxu0 %v1832
        %v2038 = vpop.f32.mrf.mxu0
        %v2039 = vadd.f32 0.0, %v2038
        %v2040 = vpop.f32.mrf.mxu0
        %v2041 = vpop.f32.mrf.mxu0
        %v2042 = vadd.f32 0.0, %v2041
        %v2043 = vpop.f32.mrf.mxu0
        %2044 = vmatprep.mubr.bf16.mxu0 0
        %2045 = vmatmul.mubr.bf16.gmra.mxu0 %v1833
        %v2046 = vpop.f32.mrf.mxu0
        %v2047 = vadd.f32 0.0, %v2046
        %v2048 = vpop.f32.mrf.mxu0
        %v2049 = vpop.f32.mrf.mxu0
        %v2050 = vadd.f32 0.0, %v2049
        %v2051 = vpop.f32.mrf.mxu0
        %2052 = vmatprep.mubr.bf16.mxu0 0
        %2053 = vmatmul.mubr.bf16.gmra.mxu0 %v1834
        %v2054 = vpop.f32.mrf.mxu0
        %v2055 = vadd.f32 0.0, %v2054
        %v2056 = vpop.f32.mrf.mxu0
        %v2057 = vpop.f32.mrf.mxu0
        %v2058 = vadd.f32 0.0, %v2057
        %v2059 = vpop.f32.mrf.mxu0
        %2060 = vdwg.mxu0
        %v2077 = vunpack.c.l.b16 %v1101
        %v2078 = vunpack.c.l.b16 %v1102
        %v2079 = vunpack.c.l.b16 %v1103
        %v2080 = vunpack.c.l.b16 %v1104
        %v2081 = vunpack.c.l.b16 %v1105
        %v2082 = vunpack.c.l.b16 %v1106
        %v2083 = vunpack.c.l.b16 %v1107
        %v2084 = vunpack.c.l.b16 %v1108
        %v2085 = vunpack.c.l.b16 %v1109
        %v2086 = vunpack.c.l.b16 %v1110
        %v2087 = vunpack.c.l.b16 %v1111
        %v2088 = vunpack.c.l.b16 %v1112
        %v2089 = vunpack.c.l.b16 %v1113
        %v2090 = vunpack.c.l.b16 %v1114
        %v2091 = vunpack.c.l.b16 %v1115
        %v2092 = vunpack.c.l.b16 %v1116
        %v2093 = vpack.c.b16 %v2078, %v2077
        %v2094 = vpack.c.b16 %v2080, %v2079
        %v2095 = vpack.c.b16 %v2082, %v2081
        %v2096 = vpack.c.b16 %v2084, %v2083
        %v2097 = vpack.c.b16 %v2086, %v2085
        %v2098 = vpack.c.b16 %v2088, %v2087
        %v2099 = vpack.c.b16 %v2090, %v2089
        %v2100 = vpack.c.b16 %v2092, %v2091
        %2109 = vmatprep.subr.bf16.mxu0 0
        %2110 = vmatpush1.bf16.msra.mxu0 %v2100
        %2111 = vmatprep.subr.bf16.mxu0 0
        %2112 = vmatpush1.bf16.msra.mxu0 %v2099
        %2113 = vmatprep.subr.bf16.mxu0 0
        %2114 = vmatpush1.bf16.msra.mxu0 %v2098
        %2115 = vmatprep.subr.bf16.mxu0 0
        %2116 = vmatpush1.bf16.msra.mxu0 %v2097
        %2117 = vmatprep.subr.bf16.mxu0 0
        %2118 = vmatpush1.bf16.msra.mxu0 %v2096
        %2119 = vmatprep.subr.bf16.mxu0 0
        %2120 = vmatpush1.bf16.msra.mxu0 %v2095
        %2121 = vmatprep.subr.bf16.mxu0 0
        %2122 = vmatpush1.bf16.msra.mxu0 %v2094
        %2123 = vmatprep.subr.bf16.mxu0 0
        %2124 = vmatpush1.bf16.msra.mxu0 %v2093
        %2125 = vmatprep.subr.bf16.mxu0 0
        %2126 = vmatpush2.bf16.msra.mxu0 0
        %2127 = vmatprep.subr.bf16.mxu0 0
        %2128 = vmatpush2.bf16.msra.mxu0 0
        %2129 = vmatprep.subr.bf16.mxu0 0
        %2130 = vmatpush2.bf16.msra.mxu0 0
        %2131 = vmatprep.subr.bf16.mxu0 0
        %2132 = vmatpush2.bf16.msra.mxu0 0
        %2133 = vmatprep.subr.bf16.mxu0 0
        %2134 = vmatpush2.bf16.msra.mxu0 0
        %2135 = vmatprep.subr.bf16.mxu0 0
        %2136 = vmatpush2.bf16.msra.mxu0 0
        %2137 = vmatprep.subr.bf16.mxu0 0
        %2138 = vmatpush2.bf16.msra.mxu0 0
        %2139 = vmatprep.subr.bf16.mxu0 0
        %2140 = vmatpush2.bf16.msra.mxu0 0
        %2141 = vmatprep.mubr.bf16.mxu0 0
        %2142 = vmatmul.mubr.bf16.gmra.mxu0 %v1084
        %v2143 = vpop.f32.mrf.mxu0
        %v2144 = vadd.f32 %v1935, %v2143
        %v2145 = vpop.f32.mrf.mxu0
        %v2146 = vpop.f32.mrf.mxu0
        %v2147 = vadd.f32 %v1938, %v2146
        %v2148 = vpop.f32.mrf.mxu0
        %2149 = vmatprep.mubr.bf16.mxu0 0
        %2150 = vmatmul.mubr.bf16.gmra.mxu0 %v1085
        %v2151 = vpop.f32.mrf.mxu0
        %v2152 = vadd.f32 %v1943, %v2151
        %v2153 = vpop.f32.mrf.mxu0
        %v2154 = vpop.f32.mrf.mxu0
        %v2155 = vadd.f32 %v1946, %v2154
        %v2156 = vpop.f32.mrf.mxu0
        %2157 = vmatprep.mubr.bf16.mxu0 0
        %2158 = vmatmul.mubr.bf16.gmra.mxu0 %v1086
        %v2159 = vpop.f32.mrf.mxu0
        %v2160 = vadd.f32 %v1951, %v2159
        %v2161 = vpop.f32.mrf.mxu0
        %v2162 = vpop.f32.mrf.mxu0
        %v2163 = vadd.f32 %v1954, %v2162
        %v2164 = vpop.f32.mrf.mxu0
        %2165 = vmatprep.mubr.bf16.mxu0 0
        %2166 = vmatmul.mubr.bf16.gmra.mxu0 %v1087
        %v2167 = vpop.f32.mrf.mxu0
        %v2168 = vadd.f32 %v1959, %v2167
        %v2169 = vpop.f32.mrf.mxu0
        %v2170 = vpop.f32.mrf.mxu0
        %v2171 = vadd.f32 %v1962, %v2170
        %v2172 = vpop.f32.mrf.mxu0
        %2173 = vmatprep.mubr.bf16.mxu0 0
        %2174 = vmatmul.mubr.bf16.gmra.mxu0 %v1088
        %v2175 = vpop.f32.mrf.mxu0
        %v2176 = vadd.f32 %v1967, %v2175
        %v2177 = vpop.f32.mrf.mxu0
        %v2178 = vpop.f32.mrf.mxu0
        %v2179 = vadd.f32 %v1970, %v2178
        %v2180 = vpop.f32.mrf.mxu0
        %2181 = vmatprep.mubr.bf16.mxu0 0
        %2182 = vmatmul.mubr.bf16.gmra.mxu0 %v1089
        %v2183 = vpop.f32.mrf.mxu0
        %v2184 = vadd.f32 %v1975, %v2183
        %v2185 = vpop.f32.mrf.mxu0
        %v2186 = vpop.f32.mrf.mxu0
        %v2187 = vadd.f32 %v1978, %v2186
        %v2188 = vpop.f32.mrf.mxu0
        %2189 = vmatprep.mubr.bf16.mxu0 0
        %2190 = vmatmul.mubr.bf16.gmra.mxu0 %v1090
        %v2191 = vpop.f32.mrf.mxu0
        %v2192 = vadd.f32 %v1983, %v2191
        %v2193 = vpop.f32.mrf.mxu0
        %v2194 = vpop.f32.mrf.mxu0
        %v2195 = vadd.f32 %v1986, %v2194
        %v2196 = vpop.f32.mrf.mxu0
        %2197 = vmatprep.mubr.bf16.mxu0 0
        %2198 = vmatmul.mubr.bf16.gmra.mxu0 %v1091
        %v2199 = vpop.f32.mrf.mxu0
        %v2200 = vadd.f32 %v1991, %v2199
        %v2201 = vpop.f32.mrf.mxu0
        %v2202 = vpop.f32.mrf.mxu0
        %v2203 = vadd.f32 %v1994, %v2202
        %v2204 = vpop.f32.mrf.mxu0
        %2205 = vmatprep.mubr.bf16.mxu0 0
        %2206 = vmatmul.mubr.bf16.gmra.mxu0 %v1092
        %v2207 = vpop.f32.mrf.mxu0
        %v2208 = vadd.f32 %v1999, %v2207
        %v2209 = vpop.f32.mrf.mxu0
        %v2210 = vpop.f32.mrf.mxu0
        %v2211 = vadd.f32 %v2002, %v2210
        %v2212 = vpop.f32.mrf.mxu0
        %2213 = vmatprep.mubr.bf16.mxu0 0
        %2214 = vmatmul.mubr.bf16.gmra.mxu0 %v1093
        %v2215 = vpop.f32.mrf.mxu0
        %v2216 = vadd.f32 %v2007, %v2215
        %v2217 = vpop.f32.mrf.mxu0
        %v2218 = vpop.f32.mrf.mxu0
        %v2219 = vadd.f32 %v2010, %v2218
        %v2220 = vpop.f32.mrf.mxu0
        %2221 = vmatprep.mubr.bf16.mxu0 0
        %2222 = vmatmul.mubr.bf16.gmra.mxu0 %v1094
        %v2223 = vpop.f32.mrf.mxu0
        %v2224 = vadd.f32 %v2015, %v2223
        %v2225 = vpop.f32.mrf.mxu0
        %v2226 = vpop.f32.mrf.mxu0
        %v2227 = vadd.f32 %v2018, %v2226
        %v2228 = vpop.f32.mrf.mxu0
        %2229 = vmatprep.mubr.bf16.mxu0 0
        %2230 = vmatmul.mubr.bf16.gmra.mxu0 %v1095
        %v2231 = vpop.f32.mrf.mxu0
        %v2232 = vadd.f32 %v2023, %v2231
        %v2233 = vpop.f32.mrf.mxu0
        %v2234 = vpop.f32.mrf.mxu0
        %v2235 = vadd.f32 %v2026, %v2234
        %v2236 = vpop.f32.mrf.mxu0
        %2237 = vmatprep.mubr.bf16.mxu0 0
        %2238 = vmatmul.mubr.bf16.gmra.mxu0 %v1096
        %v2239 = vpop.f32.mrf.mxu0
        %v2240 = vadd.f32 %v2031, %v2239
        %v2241 = vpop.f32.mrf.mxu0
        %v2242 = vpop.f32.mrf.mxu0
        %v2243 = vadd.f32 %v2034, %v2242
        %v2244 = vpop.f32.mrf.mxu0
        %2245 = vmatprep.mubr.bf16.mxu0 0
        %2246 = vmatmul.mubr.bf16.gmra.mxu0 %v1097
        %v2247 = vpop.f32.mrf.mxu0
        %v2248 = vadd.f32 %v2039, %v2247
        %v2249 = vpop.f32.mrf.mxu0
        %v2250 = vpop.f32.mrf.mxu0
        %v2251 = vadd.f32 %v2042, %v2250
        %v2252 = vpop.f32.mrf.mxu0
        %2253 = vmatprep.mubr.bf16.mxu0 0
        %2254 = vmatmul.mubr.bf16.gmra.mxu0 %v1098
        %v2255 = vpop.f32.mrf.mxu0
        %v2256 = vadd.f32 %v2047, %v2255
        %v2257 = vpop.f32.mrf.mxu0
        %v2258 = vpop.f32.mrf.mxu0
        %v2259 = vadd.f32 %v2050, %v2258
        %v2260 = vpop.f32.mrf.mxu0
        %2261 = vmatprep.mubr.bf16.mxu0 0
        %2262 = vmatmul.mubr.bf16.gmra.mxu0 %v1099
        %v2263 = vpop.f32.mrf.mxu0
        %v2264 = vadd.f32 %v2055, %v2263
        %v2265 = vpop.f32.mrf.mxu0
        %v2266 = vpop.f32.mrf.mxu0
        %v2267 = vadd.f32 %v2058, %v2266
        %v2268 = vpop.f32.mrf.mxu0
        %2269 = vdwg.mxu0
        %v2270 = vld [vmem:[#allocation8 + $0x4] sm:$0x1]
        %v2271 = vlaneseq
        %v2272 = vshrl.u32 %v2271, 7
        %v2273 = vsub.s32 0, %v2272
        %v2274 = vrot.slane %v2270, %v2273
        %v2275 = vadd.f32 %v2144, %v2274
        %v2276 = vadd.f32 %v2147, %v2274
        %v2277 = vadd.f32 %v2152, %v2274
        %v2278 = vadd.f32 %v2155, %v2274
        %v2279 = vadd.f32 %v2160, %v2274
        %v2280 = vadd.f32 %v2163, %v2274
        %v2281 = vadd.f32 %v2168, %v2274
        %v2282 = vadd.f32 %v2171, %v2274
        %v2283 = vadd.f32 %v2176, %v2274
        %v2284 = vadd.f32 %v2179, %v2274
        %v2285 = vadd.f32 %v2184, %v2274
        %v2286 = vadd.f32 %v2187, %v2274
        %v2287 = vadd.f32 %v2192, %v2274
        %v2288 = vadd.f32 %v2195, %v2274
        %v2289 = vadd.f32 %v2200, %v2274
        %v2290 = vadd.f32 %v2203, %v2274
        %v2291 = vadd.f32 %v2208, %v2274
        %v2292 = vadd.f32 %v2211, %v2274
        %v2293 = vadd.f32 %v2216, %v2274
        %v2294 = vadd.f32 %v2219, %v2274
        %v2295 = vadd.f32 %v2224, %v2274
        %v2296 = vadd.f32 %v2227, %v2274
        %v2297 = vadd.f32 %v2232, %v2274
        %v2298 = vadd.f32 %v2235, %v2274
        %v2299 = vadd.f32 %v2240, %v2274
        %v2300 = vadd.f32 %v2243, %v2274
        %v2301 = vadd.f32 %v2248, %v2274
        %v2302 = vadd.f32 %v2251, %v2274
        %v2303 = vadd.f32 %v2256, %v2274
        %v2304 = vadd.f32 %v2259, %v2274
        %v2305 = vadd.f32 %v2264, %v2274
        %v2306 = vadd.f32 %v2267, %v2274
        %2307 = vst [vmem:[%s282] sm:$0xff] %v2275
        %2308 = vst [vmem:[%s282 + $0x8] sm:$0xff] %v2276
        %2309 = vst [vmem:[%s282 + $0x10] sm:$0xff] %v2277
        %2310 = vst [vmem:[%s282 + $0x18] sm:$0xff] %v2278
        %2311 = vst [vmem:[%s282 + $0x20] sm:$0xff] %v2279
        %2312 = vst [vmem:[%s282 + $0x28] sm:$0xff] %v2280
        %2313 = vst [vmem:[%s282 + $0x30] sm:$0xff] %v2281
        %2314 = vst [vmem:[%s282 + $0x38] sm:$0xff] %v2282
        %2315 = vst [vmem:[%s282 + $0x40] sm:$0xff] %v2283
        %2316 = vst [vmem:[%s282 + $0x48] sm:$0xff] %v2284
        %2317 = vst [vmem:[%s282 + $0x50] sm:$0xff] %v2285
        %2318 = vst [vmem:[%s282 + $0x58] sm:$0xff] %v2286
        %2319 = vst [vmem:[%s282 + $0x60] sm:$0xff] %v2287
        %2320 = vst [vmem:[%s282 + $0x68] sm:$0xff] %v2288
        %2321 = vst [vmem:[%s282 + $0x70] sm:$0xff] %v2289
        %2322 = vst [vmem:[%s282 + $0x78] sm:$0xff] %v2290
        %2323 = vst [vmem:[%s282 + $0x80] sm:$0xff] %v2291
        %2324 = vst [vmem:[%s282 + $0x88] sm:$0xff] %v2292
        %2325 = vst [vmem:[%s282 + $0x90] sm:$0xff] %v2293
        %2326 = vst [vmem:[%s282 + $0x98] sm:$0xff] %v2294
        %2327 = vst [vmem:[%s282 + $0xa0] sm:$0xff] %v2295
        %2328 = vst [vmem:[%s282 + $0xa8] sm:$0xff] %v2296
        %2329 = vst [vmem:[%s282 + $0xb0] sm:$0xff] %v2297
        %2330 = vst [vmem:[%s282 + $0xb8] sm:$0xff] %v2298
        %2331 = vst [vmem:[%s282 + $0xc0] sm:$0xff] %v2299
        %2332 = vst [vmem:[%s282 + $0xc8] sm:$0xff] %v2300
        %2333 = vst [vmem:[%s282 + $0xd0] sm:$0xff] %v2301
        %2334 = vst [vmem:[%s282 + $0xd8] sm:$0xff] %v2302
        %2335 = vst [vmem:[%s282 + $0xe0] sm:$0xff] %v2303
        %2336 = vst [vmem:[%s282 + $0xe8] sm:$0xff] %v2304
        %2337 = vst [vmem:[%s282 + $0xf0] sm:$0xff] %v2305
        %2338 = vst [vmem:[%s282 + $0xf8] sm:$0xff] %v2306
        %s2339 = sand.u32 %s127, 1
        %s2340 = scalar_lea.sflag [#allocation4], %s2339
        %s2341 = sand.u32 %s127, 1
        %s2342 = smul.addr %s2341, 256
        %s2343 = scalar_lea.vmem [#allocation10], %s2342
        // Predicated region
        $region53: #{tpu_custom_call.1} parent=35 // pred_check
          %p2344 = pneg %p137
        $region54: #{tpu_custom_call.1} parent=35 // pred_check_branch
          %2346 = sbr.rel (%p2344) target = $region56
        $region55: #{tpu_custom_call.1} parent=35 // pred_region
          %s2347 = smul.u32 32, %s25
          %s2349 = ssub.s32 4096, 4096
          %2350 = vsyncadd %s2340, %s2349
          %s2351 = smul.addr %s2347, 128
          %s2352 = scalar_lea.hbm %s4, %s2351
          %s2353 = sshll.u32 %s2343, 4
          %s2354 = int_to_ptr.vmem [resolvable:$true] %s2353
          %2359 = dma.vmem_to_hbm [thread:$0]  %s2354, 4096, %s2352, %s2340, 128, 128, 8
        $region56: #{tpu_custom_call.1} parent=35 // pred_fallthru
          _
      $region36: #{tpu_custom_call.1} parent=5 // pred_fallthru
        _
      %p2360 = scmp.le.s32.totalorder 2, %s20
      // Predicated region
      $region57: #{tpu_custom_call.1} parent=5 // pred_check
        %p2361 = pneg %p2360
      $region58: #{tpu_custom_call.1} parent=5 // pred_check_branch
        %2363 = sbr.rel (%p2361) target = $region60
      $region59: #{tpu_custom_call.1} parent=5 // pred_region
        %s2364 = ssub.s32 %s20, 2
        // Predicated region
        $region61: #{tpu_custom_call.1} parent=59 // pred_check
          %p2365 = pneg %p143
        $region62: #{tpu_custom_call.1} parent=59 // pred_check_branch
          %2367 = sbr.rel (%p2365) target = $region64
        $region63: #{tpu_custom_call.1} parent=59 // pred_region
          %s2368 = sand.u32 %s128, 1
          %s2369 = scalar_lea.sflag [#allocation4], %s2368
          %s2370 = sand.u32 %s128, 1
          %s2371 = smul.addr %s2370, 256
          %s2372 = scalar_lea.vmem [#allocation10], %s2371
          %2373 = dma.done %s2369, 4096
        $region64: #{tpu_custom_call.1} parent=59 // pred_fallthru
          _
      $region60: #{tpu_custom_call.1} parent=5 // pred_fallthru
        _
    $region6: #{tpu_custom_call.1} parent=1 // loop_footer
      %s24 = sadd.s32 1, %s20
    $region7: #{tpu_custom_call.1} parent=1 // loop_footer_branch
      %19 = sbr.rel target = $region3
    $region8: #{tpu_custom_call.1} parent=1 // loop_exit
      _
    %2374 = vsyncpa [#allocation3], 1
    %s2375 = scalar_lea.sflag [#allocation3], 1
    %2376 = vsyncpa %s2375, 1
    %2377 = vsyncpa [#allocation6], 1
    %s2378 = scalar_lea.sflag [#allocation6], 1
    %2379 = vsyncpa %s2378, 1
    %2380 = vsyncpa [#allocation9], 1
    %2381 = vsyncpa [#allocation4], 1
    %s2382 = scalar_lea.sflag [#allocation4], 1
    %2383 = vsyncpa %s2382, 1

</llo_original>
